<compile_context>
chip_gen: v7x
topology: tpu7x:2x2x1
jax: 0.10.0
libtpu: 0.0.40
codegen_flags: <defaults>
</compile_context>

<pallas_src>
import numpy as np
import jax
import jax.numpy as jnp
from jax.experimental import pallas as pl
from jax.experimental.pallas import tpu as pltpu

# ----------------------------- config ---------------------------------------
INPUT_SIZE = 2                   # -> D_IN = 24 * input_size = 48
UNITS = 80                       # reservoir size
OUTPUT_SIZE = 32                 # scaled-down "output_size"
D_IN = 24 * INPUT_SIZE
LEAKY = 1.0                      # default leaky == 1 branch of __init__
SPECTRAL_RADIUS = 0.9
INPUT_SCALING = 1.0
SPARSITY = 0.05
CYCLE_W, JUMP_W, JUMP_SIZE, CONN_W = 0.05, 0.5, 16, 0.08

# lane-padded feature widths (multiples of 128 -> lane-dense stores, MXU-aligned)
LANE = 128
D_PAD = ((D_IN + LANE - 1) // LANE) * LANE            # 128
U_PAD = ((UNITS + LANE - 1) // LANE) * LANE           # 128
O_PAD = ((OUTPUT_SIZE + LANE - 1) // LANE) * LANE     # 128
K1 = D_PAD + U_PAD                                    # 256  ([x | h] / [x | state] blocks)
K2 = 2 * (D_PAD + U_PAD + O_PAD)                      # 768  (6 feature blocks)
BIAS_LANE = D_PAD - 1                                 # ones-lane carrying folded biases

# row offsets of the six feature blocks inside the packed W2
_O0 = 0
_O1 = _O0 + D_PAD
_O2 = _O1 + U_PAD
_O3 = _O2 + O_PAD
_O4 = _O3 + D_PAD
_O5 = _O4 + U_PAD
_O6 = _O5 + O_PAD
assert _O6 == K2

BATCH = 256


# ------------------------ deterministic parameter init ----------------------
def _init_reservoir_np(units, cycle_weight, jump_weight, jump_size,
                       connection_weight, rng):
    W = np.ones((units, units), dtype=np.float64) * connection_weight
    random_sign = rng.random((units, units))
    W[0, units - 1] = cycle_weight
    for i in range(units - 1):
        W[i + 1, i] = cycle_weight
    jumped = 0
    while jumped + jump_size <= units:
        if jumped + jump_size == units:
            W[jumped, 0] = jump_weight
            W[0, jumped] = jump_weight
        else:
            W[jumped, jumped + jump_size] = jump_weight
            W[jumped + jump_size, jumped] = jump_weight
        jumped += jump_size
    sign = np.where(random_sign < 0.5, -1.0, 1.0)
    W = W * sign
    c = int(rng.integers(0, units))
    m = int(rng.integers(0, units))
    W[c, m] = 0.0
    return W


def _spectral_norm_scaling_np(W, rho_desired):
    e = np.linalg.eigvals(W)
    rho_curr = np.max(np.abs(e))
    return W * (rho_desired / rho_curr)


def _init_sparse_weight_np(dim_x, dim_y, density, rng):
    # equivalent of scipy.sparse.rand(...).toarray(): uniform values at sparse spots
    mask = rng.random((dim_x, dim_y)) < density
    vals = rng.random((dim_x, dim_y))
    return (mask * vals).astype(np.float64)


def _linear_params_np(in_features, out_features, rng):
    # PyTorch nn.Linear default init: U(-1/sqrt(in), 1/sqrt(in)); return W^T, b
    bound = 1.0 / np.sqrt(in_features)
    w_t = rng.uniform(-bound, bound, size=(in_features, out_features))
    b = rng.uniform(-bound, bound, size=(out_features,))
    return w_t, b


def _pad2(a, rows, cols):
    out = np.zeros((rows, cols), dtype=np.float64)
    out[:a.shape[0], :a.shape[1]] = a
    return out


def make_params(seed=0):
    """Build (deterministically) the module weights and pack them into the
    three lane-padded bf16 matrices the kernel consumes.  Biases are folded
    into the x-block row BIAS_LANE (the host sets x[:, BIAS_LANE] = 1)."""
    rng = np.random.default_rng(seed)
    kernel = _init_sparse_weight_np(D_IN, UNITS, SPARSITY * INPUT_SCALING, rng)
    W = _init_reservoir_np(UNITS, CYCLE_W, JUMP_W, JUMP_SIZE, CONN_W, rng)
    W = _spectral_norm_scaling_np(W, SPECTRAL_RADIUS)      # leaky == 1 branch
    # weight_out : Linear(D_IN + UNITS, OUTPUT_SIZE)
    wo_t, bo = _linear_params_np(D_IN + UNITS, OUTPUT_SIZE, rng)
    # weight2 : Linear(2*(D_IN + UNITS + OUTPUT_SIZE), OUTPUT_SIZE)
    w2_t, b2 = _linear_params_np(2 * (D_IN + UNITS + OUTPUT_SIZE), OUTPUT_SIZE, rng)

    # ---- pack for the kernel ------------------------------------------------
    # state = tanh(x @ Wk[:D_PAD] + h @ Wk[D_PAD:])     Wk = [kernel ; W_rec]
    wk = np.vstack([_pad2(kernel, D_PAD, U_PAD), _pad2(W, U_PAD, U_PAD)])
    assert np.all(wk[BIAS_LANE] == 0.0)                  # ones-lane must not leak into state

    # ro = tanh(x @ Wo[:D_PAD] + state @ Wo[D_PAD:])    bias folded into x-block
    wo = np.vstack([_pad2(wo_t[:D_IN], D_PAD, O_PAD),
                    _pad2(wo_t[D_IN:], U_PAD, O_PAD)])
    wo[BIAS_LANE, :OUTPUT_SIZE] = bo

    # out2 = tanh(sum of 6 block dots)                  bias folded into x-block
    s0, s1, s2 = D_IN, D_IN + UNITS, D_IN + UNITS + OUTPUT_SIZE
    s3, s4 = s2 + D_IN, s2 + D_IN + UNITS
    w2 = np.vstack([_pad2(w2_t[0:s0],   D_PAD, O_PAD),   # x
                    _pad2(w2_t[s0:s1],  U_PAD, O_PAD),   # state
                    _pad2(w2_t[s1:s2],  O_PAD, O_PAD),   # ro
                    _pad2(w2_t[s2:s3],  D_PAD, O_PAD),   # x^2
                    _pad2(w2_t[s3:s4],  U_PAD, O_PAD),   # state^2
                    _pad2(w2_t[s4:],    O_PAD, O_PAD)])  # ro^2
    w2[BIAS_LANE, :OUTPUT_SIZE] = b2
    assert np.all(w2[_O3 + BIAS_LANE] == 0.0)            # x^2-block ones-lane row stays zero

    return dict(
        wk=jnp.asarray(wk, dtype=jnp.bfloat16),
        wo=jnp.asarray(wo, dtype=jnp.bfloat16),
        w2=jnp.asarray(w2, dtype=jnp.bfloat16),
    )


# ------------------------------- Pallas kernel -------------------------------
def cycle_reservoir_kernel(x_ref, h_ref, wk_ref, wo_ref, w2_ref,
                           state_ref, out2_ref):
    f32 = jnp.float32
    x = x_ref[...]                                    # (TB, D_PAD) bf16, lane BIAS_LANE == 1
    h = h_ref[...]                                    # (TB, U_PAD) bf16

    # state = tanh(x @ kernel + h @ W_rec)   -- two K=128 dots, no concat
    state_f32 = jnp.tanh(
        jnp.dot(x, wk_ref[:D_PAD, :], preferred_element_type=f32)
        + jnp.dot(h, wk_ref[D_PAD:, :], preferred_element_type=f32))
    state = state_f32.astype(jnp.bfloat16)

    # LEAKY == 1.0 special-cased at trace time: h*(1-leaky) + state == state
    # reservoir_output = tanh(Linear([x, state]))   (bias rides the ones-lane)
    ro_f32 = jnp.tanh(
        jnp.dot(x, wo_ref[:D_PAD, :], preferred_element_type=f32)
        + jnp.dot(state, wo_ref[D_PAD:, :], preferred_element_type=f32))
    ro = ro_f32.astype(jnp.bfloat16)

    # reservoir_output2 = tanh(Linear([x, state, ro, x^2, state^2, ro^2]))
    # fully split into 6 K=128 dots on static slices of the packed W2
    acc = jnp.dot(x, w2_ref[_O0:_O1, :], preferred_element_type=f32)
    acc += jnp.dot(state, w2_ref[_O1:_O2, :], preferred_element_type=f32)
    acc += jnp.dot(ro, w2_ref[_O2:_O3, :], preferred_element_type=f32)
    acc += jnp.dot(x * x, w2_ref[_O3:_O4, :], preferred_element_type=f32)
    acc += jnp.dot(state * state, w2_ref[_O4:_O5, :], preferred_element_type=f32)
    acc += jnp.dot(ro * ro, w2_ref[_O5:_O6, :], preferred_element_type=f32)

    # lane-dense (128-wide) bf16 stores
    state_ref[...] = state
    out2_ref[...] = jnp.tanh(acc).astype(out2_ref.dtype)


def _default_num_batch_tiles():
    """grid=(2,) so the 'parallel' batch axis can shard across the two
    TensorCores on v7x-class chips; grid=(1,) on single-TC v5e/v6e where the
    extra grid step is pure overhead.  Unknown chips default to 2 (safe)."""
    try:
        kind = jax.devices()[0].device_kind.lower()
    except Exception:
        return 2
    single_tc = ("lite" in kind) or ("v5e" in kind) or ("v6e" in kind)
    return 1 if single_tc else 2


def cycle_reservoir_forward(x_pad_bf16, h_pad_bf16, params, *, num_batch_tiles=None):
    B = x_pad_bf16.shape[0]
    if num_batch_tiles is None:
        num_batch_tiles = _default_num_batch_tiles()
    assert B % num_batch_tiles == 0
    tile_b = B // num_batch_tiles
    assert tile_b % 8 == 0
    grid = (num_batch_tiles,)

    full = lambda shape: pl.BlockSpec(shape, lambda i: (0, 0))
    batched = lambda feat: pl.BlockSpec((tile_b, feat), lambda i: (i, 0))

    in_specs = [
        batched(D_PAD),                 # x  (bf16, lane-padded, ones-lane bias)
        batched(U_PAD),                 # h  (bf16, lane-padded)
        full((K1, U_PAD)),              # packed [kernel ; W_rec]
        full((K1, O_PAD)),              # packed weight_out (+ folded bias row)
        full((K2, O_PAD)),              # packed weight2   (+ folded bias row)
    ]
    out_specs = (batched(U_PAD), batched(O_PAD))
    out_shape = (jax.ShapeDtypeStruct((B, U_PAD), jnp.bfloat16),
                 jax.ShapeDtypeStruct((B, O_PAD), jnp.bfloat16))

    state_pad, out2_pad = pl.pallas_call(
        cycle_reservoir_kernel,
        grid=grid,
        in_specs=in_specs,
        out_specs=out_specs,
        out_shape=out_shape,
        compiler_params=pltpu.CompilerParams(
            dimension_semantics=("parallel",),
            # tiny here; raise toward physical VMEM at the real 4072-dim sizes
            vmem_limit_bytes=32 * 1024 * 1024),
    )(x_pad_bf16, h_pad_bf16, params["wk"], params["wo"], params["w2"])

    # slice padded lanes back to logical widths
    return state_pad[:, :UNITS], out2_pad[:, :OUTPUT_SIZE]


# --------------------------- plain-JAX reference ------------------------------
def cycle_reservoir_reference(x_pad_bf16, h_pad_bf16, p):
    """Mirrors the kernel math (bf16 operands, f32 accumulation, folded biases)."""
    f32 = jnp.float32
    x = x_pad_bf16
    h = h_pad_bf16
    state_f32 = jnp.tanh(
        jnp.dot(x, p["wk"][:D_PAD], preferred_element_type=f32)
        + jnp.dot(h, p["wk"][D_PAD:], preferred_element_type=f32))
    state = state_f32.astype(jnp.bfloat16)
    ro_f32 = jnp.tanh(
        jnp.dot(x, p["wo"][:D_PAD], preferred_element_type=f32)
        + jnp.dot(state, p["wo"][D_PAD:], preferred_element_type=f32))
    ro = ro_f32.astype(jnp.bfloat16)
    acc = jnp.dot(x, p["w2"][_O0:_O1], preferred_element_type=f32)
    acc += jnp.dot(state, p["w2"][_O1:_O2], preferred_element_type=f32)
    acc += jnp.dot(ro, p["w2"][_O2:_O3], preferred_element_type=f32)
    acc += jnp.dot(x * x, p["w2"][_O3:_O4], preferred_element_type=f32)
    acc += jnp.dot(state * state, p["w2"][_O4:_O5], preferred_element_type=f32)
    acc += jnp.dot(ro * ro, p["w2"][_O5:_O6], preferred_element_type=f32)
    out2 = jnp.tanh(acc).astype(jnp.bfloat16)
    return state[:, :UNITS], out2[:, :OUTPUT_SIZE]


# ----------------------------------- main ------------------------------------
if __name__ == "__main__":
    params = make_params(seed=0)

    key = jax.random.PRNGKey(0)
    kx, kh = jax.random.split(key)
    x = jax.random.normal(kx, (BATCH, D_IN), dtype=jnp.float32)
    h_prev = jax.random.normal(kh, (BATCH, UNITS), dtype=jnp.float32)

    # lane-pad with zeros, set the bias ones-lane, cast to bf16 once host-side
    x_pad = (jnp.zeros((BATCH, D_PAD), jnp.float32)
             .at[:, :D_IN].set(x)
             .at[:, BIAS_LANE].set(1.0))
    h_pad = jnp.zeros((BATCH, U_PAD), jnp.float32).at[:, :UNITS].set(h_prev)
    x_bf16 = x_pad.astype(jnp.bfloat16)
    h_bf16 = h_pad.astype(jnp.bfloat16)

    state, out2 = cycle_reservoir_forward(x_bf16, h_bf16, params)
    state = jax.block_until_ready(state)
    out2 = jax.block_until_ready(out2)

    state_ref, out2_ref = cycle_reservoir_reference(x_bf16, h_bf16, params)
    np.testing.assert_allclose(np.asarray(state.astype(jnp.float32)),
                               np.asarray(state_ref.astype(jnp.float32)),
                               rtol=2e-2, atol=2e-2)
    np.testing.assert_allclose(np.asarray(out2.astype(jnp.float32)),
                               np.asarray(out2_ref.astype(jnp.float32)),
                               rtol=2e-2, atol=2e-2)

    print("KERNEL_OK")
</pallas_src>

<mosaic_0001>
module attributes {stable_mosaic.version = 11 : i64} {
  func.func @cycle_reservoir_kernel(%arg0: i32, %arg1: memref<128x128xbf16, #tpu.memory_space<vmem>>, %arg2: memref<128x128xbf16, #tpu.memory_space<vmem>>, %arg3: memref<256x128xbf16, #tpu.memory_space<vmem>>, %arg4: memref<256x128xbf16, #tpu.memory_space<vmem>>, %arg5: memref<768x128xbf16, #tpu.memory_space<vmem>>, %arg6: memref<128x128xbf16, #tpu.memory_space<vmem>>, %arg7: memref<128x128xbf16, #tpu.memory_space<vmem>>) attributes {dimension_semantics = [#tpu.dimension_semantics<parallel>], iteration_bounds = array<i64: 2>, scalar_prefetch = 0 : i64, scratch_operands = 0 : i64, tpu.core_type = #tpu.core_type<tc>, window_params = [{transform_indices = @transform_0, window_bounds = array<i64: 128, 128>}, {transform_indices = @transform_1, window_bounds = array<i64: 128, 128>}, {pipeline_mode = #tpu.pipeline_mode<synchronous>, transform_indices = @transform_2, window_bounds = array<i64: 256, 128>}, {pipeline_mode = #tpu.pipeline_mode<synchronous>, transform_indices = @transform_3, window_bounds = array<i64: 256, 128>}, {pipeline_mode = #tpu.pipeline_mode<synchronous>, transform_indices = @transform_4, window_bounds = array<i64: 768, 128>}, {transform_indices = @transform_5, window_bounds = array<i64: 128, 128>}, {transform_indices = @transform_6, window_bounds = array<i64: 128, 128>}]} {
    %c0 = arith.constant 0 : index
    %c0_0 = arith.constant 0 : index
    %0 = vector.load %arg1[%c0, %c0_0] : memref<128x128xbf16, #tpu.memory_space<vmem>>, vector<128x128xbf16>
    %c0_1 = arith.constant 0 : index
    %c0_2 = arith.constant 0 : index
    %1 = vector.load %arg2[%c0_1, %c0_2] : memref<128x128xbf16, #tpu.memory_space<vmem>>, vector<128x128xbf16>
    %c0_3 = arith.constant 0 : index
    %c0_4 = arith.constant 0 : index
    %2 = vector.load %arg3[%c0_3, %c0_4] : memref<256x128xbf16, #tpu.memory_space<vmem>>, vector<128x128xbf16>
    %cst = arith.constant dense<0.000000e+00> : vector<128x128xf32>
    %3 = tpu.matmul %0, %2, %cst {dimension_numbers = #tpu.dot_dimension_numbers<[1], [0], [0], [1], [0, 0, 1, 1], [], []>} : vector<128x128xbf16>, vector<128x128xbf16>, vector<128x128xf32> -> vector<128x128xf32>
    %c128 = arith.constant 128 : index
    %c0_5 = arith.constant 0 : index
    %4 = vector.load %arg3[%c128, %c0_5] : memref<256x128xbf16, #tpu.memory_space<vmem>>, vector<128x128xbf16>
    %cst_6 = arith.constant dense<0.000000e+00> : vector<128x128xf32>
    %5 = tpu.matmul %1, %4, %cst_6 {dimension_numbers = #tpu.dot_dimension_numbers<[1], [0], [0], [1], [0, 0, 1, 1], [], []>} : vector<128x128xbf16>, vector<128x128xbf16>, vector<128x128xf32> -> vector<128x128xf32>
    %6 = arith.addf %3, %5 : vector<128x128xf32>
    %7 = math.tanh %6 : vector<128x128xf32>
    %8 = arith.truncf %7 : vector<128x128xf32> to vector<128x128xbf16>
    %c0_7 = arith.constant 0 : index
    %c0_8 = arith.constant 0 : index
    %9 = vector.load %arg4[%c0_7, %c0_8] : memref<256x128xbf16, #tpu.memory_space<vmem>>, vector<128x128xbf16>
    %cst_9 = arith.constant dense<0.000000e+00> : vector<128x128xf32>
    %10 = tpu.matmul %0, %9, %cst_9 {dimension_numbers = #tpu.dot_dimension_numbers<[1], [0], [0], [1], [0, 0, 1, 1], [], []>} : vector<128x128xbf16>, vector<128x128xbf16>, vector<128x128xf32> -> vector<128x128xf32>
    %c128_10 = arith.constant 128 : index
    %c0_11 = arith.constant 0 : index
    %11 = vector.load %arg4[%c128_10, %c0_11] : memref<256x128xbf16, #tpu.memory_space<vmem>>, vector<128x128xbf16>
    %cst_12 = arith.constant dense<0.000000e+00> : vector<128x128xf32>
    %12 = tpu.matmul %8, %11, %cst_12 {dimension_numbers = #tpu.dot_dimension_numbers<[1], [0], [0], [1], [0, 0, 1, 1], [], []>} : vector<128x128xbf16>, vector<128x128xbf16>, vector<128x128xf32> -> vector<128x128xf32>
    %13 = arith.addf %10, %12 : vector<128x128xf32>
    %14 = math.tanh %13 : vector<128x128xf32>
    %15 = arith.truncf %14 : vector<128x128xf32> to vector<128x128xbf16>
    %c0_13 = arith.constant 0 : index
    %c0_14 = arith.constant 0 : index
    %16 = vector.load %arg5[%c0_13, %c0_14] : memref<768x128xbf16, #tpu.memory_space<vmem>>, vector<128x128xbf16>
    %cst_15 = arith.constant dense<0.000000e+00> : vector<128x128xf32>
    %17 = tpu.matmul %0, %16, %cst_15 {dimension_numbers = #tpu.dot_dimension_numbers<[1], [0], [0], [1], [0, 0, 1, 1], [], []>} : vector<128x128xbf16>, vector<128x128xbf16>, vector<128x128xf32> -> vector<128x128xf32>
    %c128_16 = arith.constant 128 : index
    %c0_17 = arith.constant 0 : index
    %18 = vector.load %arg5[%c128_16, %c0_17] : memref<768x128xbf16, #tpu.memory_space<vmem>>, vector<128x128xbf16>
    %cst_18 = arith.constant dense<0.000000e+00> : vector<128x128xf32>
    %19 = tpu.matmul %8, %18, %cst_18 {dimension_numbers = #tpu.dot_dimension_numbers<[1], [0], [0], [1], [0, 0, 1, 1], [], []>} : vector<128x128xbf16>, vector<128x128xbf16>, vector<128x128xf32> -> vector<128x128xf32>
    %20 = arith.addf %17, %19 : vector<128x128xf32>
    %c256 = arith.constant 256 : index
    %c0_19 = arith.constant 0 : index
    %21 = vector.load %arg5[%c256, %c0_19] : memref<768x128xbf16, #tpu.memory_space<vmem>>, vector<128x128xbf16>
    %cst_20 = arith.constant dense<0.000000e+00> : vector<128x128xf32>
    %22 = tpu.matmul %15, %21, %cst_20 {dimension_numbers = #tpu.dot_dimension_numbers<[1], [0], [0], [1], [0, 0, 1, 1], [], []>} : vector<128x128xbf16>, vector<128x128xbf16>, vector<128x128xf32> -> vector<128x128xf32>
    %23 = arith.addf %20, %22 : vector<128x128xf32>
    %24 = arith.mulf %0, %0 : vector<128x128xbf16>
    %c384 = arith.constant 384 : index
    %c0_21 = arith.constant 0 : index
    %25 = vector.load %arg5[%c384, %c0_21] : memref<768x128xbf16, #tpu.memory_space<vmem>>, vector<128x128xbf16>
    %cst_22 = arith.constant dense<0.000000e+00> : vector<128x128xf32>
    %26 = tpu.matmul %24, %25, %cst_22 {dimension_numbers = #tpu.dot_dimension_numbers<[1], [0], [0], [1], [0, 0, 1, 1], [], []>} : vector<128x128xbf16>, vector<128x128xbf16>, vector<128x128xf32> -> vector<128x128xf32>
    %27 = arith.addf %23, %26 : vector<128x128xf32>
    %28 = arith.mulf %8, %8 : vector<128x128xbf16>
    %c512 = arith.constant 512 : index
    %c0_23 = arith.constant 0 : index
    %29 = vector.load %arg5[%c512, %c0_23] : memref<768x128xbf16, #tpu.memory_space<vmem>>, vector<128x128xbf16>
    %cst_24 = arith.constant dense<0.000000e+00> : vector<128x128xf32>
    %30 = tpu.matmul %28, %29, %cst_24 {dimension_numbers = #tpu.dot_dimension_numbers<[1], [0], [0], [1], [0, 0, 1, 1], [], []>} : vector<128x128xbf16>, vector<128x128xbf16>, vector<128x128xf32> -> vector<128x128xf32>
    %31 = arith.addf %27, %30 : vector<128x128xf32>
    %32 = arith.mulf %15, %15 : vector<128x128xbf16>
    %c640 = arith.constant 640 : index
    %c0_25 = arith.constant 0 : index
    %33 = vector.load %arg5[%c640, %c0_25] : memref<768x128xbf16, #tpu.memory_space<vmem>>, vector<128x128xbf16>
    %cst_26 = arith.constant dense<0.000000e+00> : vector<128x128xf32>
    %34 = tpu.matmul %32, %33, %cst_26 {dimension_numbers = #tpu.dot_dimension_numbers<[1], [0], [0], [1], [0, 0, 1, 1], [], []>} : vector<128x128xbf16>, vector<128x128xbf16>, vector<128x128xf32> -> vector<128x128xf32>
    %35 = arith.addf %31, %34 : vector<128x128xf32>
    %c0_27 = arith.constant 0 : index
    %c0_28 = arith.constant 0 : index
    %36 = vector.load %arg6[%c0_27, %c0_28] : memref<128x128xbf16, #tpu.memory_space<vmem>>, vector<128x128xbf16>
    tpu.vector_store %arg6[%c0_27, %c0_28], %8 {strides = array<i32>} : memref<128x128xbf16, #tpu.memory_space<vmem>>, vector<128x128xbf16>,
    %37 = math.tanh %35 : vector<128x128xf32>
    %38 = arith.truncf %37 : vector<128x128xf32> to vector<128x128xbf16>
    %c0_29 = arith.constant 0 : index
    %c0_30 = arith.constant 0 : index
    %39 = vector.load %arg7[%c0_29, %c0_30] : memref<128x128xbf16, #tpu.memory_space<vmem>>, vector<128x128xbf16>
    tpu.vector_store %arg7[%c0_29, %c0_30], %38 {strides = array<i32>} : memref<128x128xbf16, #tpu.memory_space<vmem>>, vector<128x128xbf16>,
    return
  }
  func.func @transform_0(%arg0: i32) -> (i32, i32) {
    %c0_i32 = arith.constant 0 : i32
    %c0_i32_0 = arith.constant 0 : i32
    return %arg0, %c0_i32 : i32, i32
  }
  func.func @transform_1(%arg0: i32) -> (i32, i32) {
    %c0_i32 = arith.constant 0 : i32
    %c0_i32_0 = arith.constant 0 : i32
    return %arg0, %c0_i32 : i32, i32
  }
  func.func @transform_2(%arg0: i32) -> (i32, i32) {
    %c0_i32 = arith.constant 0 : i32
    %c0_i32_0 = arith.constant 0 : i32
    %c0_i32_1 = arith.constant 0 : i32
    return %c0_i32, %c0_i32_0 : i32, i32
  }
  func.func @transform_3(%arg0: i32) -> (i32, i32) {
    %c0_i32 = arith.constant 0 : i32
    %c0_i32_0 = arith.constant 0 : i32
    %c0_i32_1 = arith.constant 0 : i32
    return %c0_i32, %c0_i32_0 : i32, i32
  }
  func.func @transform_4(%arg0: i32) -> (i32, i32) {
    %c0_i32 = arith.constant 0 : i32
    %c0_i32_0 = arith.constant 0 : i32
    %c0_i32_1 = arith.constant 0 : i32
    return %c0_i32, %c0_i32_0 : i32, i32
  }
  func.func @transform_5(%arg0: i32) -> (i32, i32) {
    %c0_i32 = arith.constant 0 : i32
    %c0_i32_0 = arith.constant 0 : i32
    return %arg0, %c0_i32 : i32, i32
  }
  func.func @transform_6(%arg0: i32) -> (i32, i32) {
    %c0_i32 = arith.constant 0 : i32
    %c0_i32_0 = arith.constant 0 : i32
    return %arg0, %c0_i32 : i32, i32
  }
}

</mosaic_0001>

<llo_original>
// kernel: tpu_custom_call.1
$region0: #{tpu_custom_call.1}
  #allocation0 [shape = 'u32[]', space=smem, size = 0x4, offset = 0x4, fixed_abs, tag = 'smem constant byte address 0x4 - core index']
  #allocation1 [shape = 'u32[144,128]{1,0:T(1,128)}', space=vmem, size = 0x12000, scoped, tag = 'internal scratch']
  %s0 = inlined_call_operand.hbm [shape: bf16[256,128], index: 0, kind: input, shape index: {}]
  %s1 = inlined_call_operand.hbm [shape: bf16[256,128], index: 1, kind: input, shape index: {}]
  %s2 = inlined_call_operand.hbm [shape: bf16[256,128], index: 2, kind: input, shape index: {}]
  %s3 = inlined_call_operand.hbm [shape: bf16[256,128], index: 3, kind: input, shape index: {}]
  %s4 = inlined_call_operand.hbm [shape: bf16[768,128], index: 4, kind: input, shape index: {}]
  %s5 = inlined_call_operand.hbm [shape: bf16[256,128], index: 5, kind: output, shape index: {0}]
  %s6 = inlined_call_operand.hbm [shape: bf16[256,128], index: 6, kind: output, shape index: {1}]
  %7 = xla_tuple %s5, %s6
  %s8 = sld [smem:[#allocation0]]
  $region81: #{tpu_custom_call.1} parent=0
    _
  %s10 = ssub.s32 1, %s8
  %s11 = scalar_select 0, %s10, %s8
  $region1: #{tpu_custom_call.1} parent=0
    #allocation2 [shape = 'u8[65536]{0}', space=vmem, size = 0x10000, scoped, tag = 'input window, operand 0']
    #allocation3 [shape = 's32[2]{0}', space=sflag, size = 0x8, scoped, tag = 'scoped memory for tpu_custom_call.1']
    #allocation4 [shape = 's32[2]{0}', space=sflag, size = 0x8, scoped, tag = 'scoped memory for tpu_custom_call.1']
    #allocation5 [shape = 'u8[65536]{0}', space=vmem, size = 0x10000, scoped, tag = 'input window, operand 1']
    #allocation6 [shape = 's32[2]{0}', space=sflag, size = 0x8, scoped, tag = 'scoped memory for tpu_custom_call.1']
    #allocation7 [shape = 'u8[65536]{0}', space=vmem, size = 0x10000, scoped, tag = 'input window, operand 2, single buffered']
    #allocation8 [shape = 'u8[65536]{0}', space=vmem, size = 0x10000, scoped, tag = 'input window, operand 3, single buffered']
    #allocation9 [shape = 's32[1]{0}', space=sflag, size = 0x4, scoped, tag = 'scoped memory for tpu_custom_call.1']
    #allocation10 [shape = 'u8[196608]{0}', space=vmem, size = 0x30000, scoped, tag = 'input window, operand 4, single buffered']
    #allocation11 [shape = 'u8[65536]{0}', space=vmem, size = 0x10000, scoped, tag = 'output window, operand 0']
    #allocation12 [shape = 'u8[65536]{0}', space=vmem, size = 0x10000, scoped, tag = 'output window, operand 1']
    #allocation13 [shape = 's32[2]{0}', space=sflag, size = 0x8, scoped, tag = 'scoped memory for tpu_custom_call.1']
    %12 = vsyncpa [#allocation3], 0
    %s13 = scalar_lea.sflag [#allocation3], 1
    %14 = vsyncpa %s13, 0
    %15 = vsyncpa [#allocation6], 0
    %s16 = scalar_lea.sflag [#allocation6], 1
    %17 = vsyncpa %s16, 0
    %18 = vsyncpa [#allocation9], 0
    %19 = vsyncpa [#allocation4], 0
    %s20 = scalar_lea.sflag [#allocation4], 1
    %21 = vsyncpa %s20, 0
    %22 = vsyncpa [#allocation13], 0
    %s23 = scalar_lea.sflag [#allocation13], 1
    %24 = vsyncpa %s23, 0
    loop: start=0, step=1, limit=4
    $region2: #{tpu_custom_call.1} parent=1 // loop_pre_header
      _
    $region3: #{tpu_custom_call.1} parent=1 // loop_header
      %s26 = sphi 0, %s30
      %p27 = scmp.ge.s32.totalorder %s26, 4
      %s36 = sphi 0, %s38
      %s39 = sphi 0, %s36
      %s40 = sphi 0, %s39
      %s56 = sphi 0, %s40
      %s62 = sphi 0, %s64
      %s65 = sphi 0, %s62
      %s66 = sphi 0, %s65
      %s82 = sphi 0, %s66
      %s86 = sphi 0, %s86
      %s88 = sphi 0, %s86
      %s89 = sphi 0, %s88
      %s103 = sphi 0, %s89
      %s107 = sphi 0, %s107
      %s109 = sphi 0, %s107
      %s110 = sphi 0, %s109
      %s124 = sphi 0, %s110
      %s128 = sphi 0, %s128
      %s130 = sphi 0, %s128
      %s131 = sphi 0, %s130
      %s145 = sphi 0, %s131
      %s151 = sphi 0, %s153
      %s154 = sphi 0, %s151
      %s155 = sphi 0, %s154
      %s171 = sphi 0, %s155
      %s177 = sphi 0, %s179
      %s180 = sphi 0, %s177
      %s181 = sphi 0, %s180
      %s197 = sphi 0, %s181
    $region4: #{tpu_custom_call.1} parent=1 // loop_header_branch
      %29 = sbr.rel (%p27) target = $region8
    $region5: #{tpu_custom_call.1} parent=1 // loop_body
      %s31 = ssub.s32 %s26, 1
      %s32 = ssub.s32 %s26, 2
      %s33 = sadd.s32 %s26, 1
      %s34 = ssub.s32 %s26, %s33
      %p35 = scmp.eq.s32.totalorder %s34, 0
      %s37 = sadd.s32 %s36, 1
      %s38 = scalar_select %p35, %s36, %s37
      %p41 = pneg %p35
      %p42 = scmp.eq.s32.totalorder %s26, 1
      %p43 = por %p41, %p42
      %p44 = scmp.ne.s32.totalorder %s36, %s39
      %p45 = scmp.eq.s32.totalorder %s26, 0
      %p46 = por %p44, %p45
      %p47 = scmp.ne.s32.totalorder %s36, %s39
      %p48 = scmp.eq.s32.totalorder %s31, 1
      %p49 = por %p47, %p48
      %p50 = scmp.ne.s32.totalorder %s39, %s40
      %p51 = scmp.eq.s32.totalorder %s31, 0
      %p52 = por %p50, %p51
      %p53 = scmp.ne.s32.totalorder %s39, %s40
      %p54 = scmp.eq.s32.totalorder %s32, 1
      %p55 = por %p53, %p54
      %p57 = scmp.ne.s32.totalorder %s40, %s56
      %p58 = scmp.eq.s32.totalorder %s32, 0
      %p59 = por %p57, %p58
      %s60 = ssub.s32 %s26, %s33
      %p61 = scmp.eq.s32.totalorder %s60, 0
      %s63 = sadd.s32 %s62, 1
      %s64 = scalar_select %p61, %s62, %s63
      %p67 = pneg %p61
      %p68 = scmp.eq.s32.totalorder %s26, 1
      %p69 = por %p67, %p68
      %p70 = scmp.ne.s32.totalorder %s62, %s65
      %p71 = scmp.eq.s32.totalorder %s26, 0
      %p72 = por %p70, %p71
      %p73 = scmp.ne.s32.totalorder %s62, %s65
      %p74 = scmp.eq.s32.totalorder %s31, 1
      %p75 = por %p73, %p74
      %p76 = scmp.ne.s32.totalorder %s65, %s66
      %p77 = scmp.eq.s32.totalorder %s31, 0
      %p78 = por %p76, %p77
      %p79 = scmp.ne.s32.totalorder %s65, %s66
      %p80 = scmp.eq.s32.totalorder %s32, 1
      %p81 = por %p79, %p80
      %p83 = scmp.ne.s32.totalorder %s66, %s82
      %p84 = scmp.eq.s32.totalorder %s32, 0
      %p85 = por %p83, %p84
      %s87 = sadd.s32 %s86, 1
      %p90 = scmp.eq.s32.totalorder %s26, 1
      %p91 = scmp.ne.s32.totalorder %s86, %s88
      %p92 = scmp.eq.s32.totalorder %s26, 0
      %p93 = por %p91, %p92
      %p94 = scmp.ne.s32.totalorder %s86, %s88
      %p95 = scmp.eq.s32.totalorder %s31, 1
      %p96 = por %p94, %p95
      %p97 = scmp.ne.s32.totalorder %s88, %s89
      %p98 = scmp.eq.s32.totalorder %s31, 0
      %p99 = por %p97, %p98
      %p100 = scmp.ne.s32.totalorder %s88, %s89
      %p101 = scmp.eq.s32.totalorder %s32, 1
      %p102 = por %p100, %p101
      %p104 = scmp.ne.s32.totalorder %s89, %s103
      %p105 = scmp.eq.s32.totalorder %s32, 0
      %p106 = por %p104, %p105
      %s108 = sadd.s32 %s107, 1
      %p111 = scmp.eq.s32.totalorder %s26, 1
      %p112 = scmp.ne.s32.totalorder %s107, %s109
      %p113 = scmp.eq.s32.totalorder %s26, 0
      %p114 = por %p112, %p113
      %p115 = scmp.ne.s32.totalorder %s107, %s109
      %p116 = scmp.eq.s32.totalorder %s31, 1
      %p117 = por %p115, %p116
      %p118 = scmp.ne.s32.totalorder %s109, %s110
      %p119 = scmp.eq.s32.totalorder %s31, 0
      %p120 = por %p118, %p119
      %p121 = scmp.ne.s32.totalorder %s109, %s110
      %p122 = scmp.eq.s32.totalorder %s32, 1
      %p123 = por %p121, %p122
      %p125 = scmp.ne.s32.totalorder %s110, %s124
      %p126 = scmp.eq.s32.totalorder %s32, 0
      %p127 = por %p125, %p126
      %s129 = sadd.s32 %s128, 1
      %p132 = scmp.eq.s32.totalorder %s26, 1
      %p133 = scmp.ne.s32.totalorder %s128, %s130
      %p134 = scmp.eq.s32.totalorder %s26, 0
      %p135 = por %p133, %p134
      %p136 = scmp.ne.s32.totalorder %s128, %s130
      %p137 = scmp.eq.s32.totalorder %s31, 1
      %p138 = por %p136, %p137
      %p139 = scmp.ne.s32.totalorder %s130, %s131
      %p140 = scmp.eq.s32.totalorder %s31, 0
      %p141 = por %p139, %p140
      %p142 = scmp.ne.s32.totalorder %s130, %s131
      %p143 = scmp.eq.s32.totalorder %s32, 1
      %p144 = por %p142, %p143
      %p146 = scmp.ne.s32.totalorder %s131, %s145
      %p147 = scmp.eq.s32.totalorder %s32, 0
      %p148 = por %p146, %p147
      %s149 = ssub.s32 %s26, %s33
      %p150 = scmp.eq.s32.totalorder %s149, 0
      %s152 = sadd.s32 %s151, 1
      %s153 = scalar_select %p150, %s151, %s152
      %p156 = pneg %p150
      %p157 = scmp.eq.s32.totalorder %s26, 1
      %p158 = por %p156, %p157
      %p159 = scmp.ne.s32.totalorder %s151, %s154
      %p160 = scmp.eq.s32.totalorder %s26, 0
      %p161 = por %p159, %p160
      %p162 = scmp.ne.s32.totalorder %s151, %s154
      %p163 = scmp.eq.s32.totalorder %s31, 1
      %p164 = por %p162, %p163
      %p165 = scmp.ne.s32.totalorder %s154, %s155
      %p166 = scmp.eq.s32.totalorder %s31, 0
      %p167 = por %p165, %p166
      %p168 = scmp.ne.s32.totalorder %s154, %s155
      %p169 = scmp.eq.s32.totalorder %s32, 1
      %p170 = por %p168, %p169
      %p172 = scmp.ne.s32.totalorder %s155, %s171
      %p173 = scmp.eq.s32.totalorder %s32, 0
      %p174 = por %p172, %p173
      %s175 = ssub.s32 %s26, %s33
      %p176 = scmp.eq.s32.totalorder %s175, 0
      %s178 = sadd.s32 %s177, 1
      %s179 = scalar_select %p176, %s177, %s178
      %p182 = pneg %p176
      %p183 = scmp.eq.s32.totalorder %s26, 1
      %p184 = por %p182, %p183
      %p185 = scmp.ne.s32.totalorder %s177, %s180
      %p186 = scmp.eq.s32.totalorder %s26, 0
      %p187 = por %p185, %p186
      %p188 = scmp.ne.s32.totalorder %s177, %s180
      %p189 = scmp.eq.s32.totalorder %s31, 1
      %p190 = por %p188, %p189
      %p191 = scmp.ne.s32.totalorder %s180, %s181
      %p192 = scmp.eq.s32.totalorder %s31, 0
      %p193 = por %p191, %p192
      %p194 = scmp.ne.s32.totalorder %s180, %s181
      %p195 = scmp.eq.s32.totalorder %s32, 1
      %p196 = por %p194, %p195
      %p198 = scmp.ne.s32.totalorder %s181, %s197
      %p199 = scmp.eq.s32.totalorder %s32, 0
      %p200 = por %p198, %p199
      %p201 = scmp.le.s32.totalorder 1, %s26
      %p202 = scmp.lt.s32.totalorder %s26, 3
      %p203 = pnand %p201, %p202
      %p204 = pneg %p203
      // Predicated region
      $region9: #{tpu_custom_call.1} parent=5 // pred_check
        _
      $region10: #{tpu_custom_call.1} parent=5 // pred_check_branch
        %206 = sbr.rel (%p203) target = $region12
      $region11: #{tpu_custom_call.1} parent=5 // pred_region
        %s207 = ssub.s32 %s26, 1
        // Predicated region
        $region13: #{tpu_custom_call.1} parent=11 // pred_check
          %p208 = pneg %p99
        $region14: #{tpu_custom_call.1} parent=11 // pred_check_branch
          %210 = sbr.rel (%p208) target = $region16
        $region15: #{tpu_custom_call.1} parent=11 // pred_region
          %s212 = ssub.s32 2048, 2048
          %213 = vsyncadd [#allocation6], %s212
          %s214 = sshll.u32 [#allocation7], 4
          %s215 = int_to_ptr.vmem [resolvable:$true] %s214
          %220 = dma.hbm_to_vmem [thread:$0]  %s2, 2048, %s215, [#allocation6], 64, 64, 4
        $region16: #{tpu_custom_call.1} parent=11 // pred_fallthru
          _
        // Predicated region
        $region17: #{tpu_custom_call.1} parent=11 // pred_check
          %p221 = pneg %p120
        $region18: #{tpu_custom_call.1} parent=11 // pred_check_branch
          %223 = sbr.rel (%p221) target = $region20
        $region19: #{tpu_custom_call.1} parent=11 // pred_region
          %s225 = ssub.s32 2048, 2048
          %226 = vsyncadd [#allocation9], %s225
          %s227 = sshll.u32 [#allocation8], 4
          %s228 = int_to_ptr.vmem [resolvable:$true] %s227
          %233 = dma.hbm_to_vmem [thread:$0]  %s3, 2048, %s228, [#allocation9], 64, 64, 4
        $region20: #{tpu_custom_call.1} parent=11 // pred_fallthru
          _
        // Predicated region
        $region21: #{tpu_custom_call.1} parent=11 // pred_check
          %p234 = pneg %p141
        $region22: #{tpu_custom_call.1} parent=11 // pred_check_branch
          %236 = sbr.rel (%p234) target = $region24
        $region23: #{tpu_custom_call.1} parent=11 // pred_region
          %s238 = ssub.s32 6144, 6144
          %239 = vsyncadd [#allocation9], %s238
          %s240 = sshll.u32 [#allocation10], 4
          %s241 = int_to_ptr.vmem [resolvable:$true] %s240
          %246 = dma.hbm_to_vmem [thread:$0]  %s4, 6144, %s241, [#allocation9], 64, 64, 4
        $region24: #{tpu_custom_call.1} parent=11 // pred_fallthru
          _
      $region12: #{tpu_custom_call.1} parent=5 // pred_fallthru
        _
      %p247 = scmp.lt.s32.totalorder %s26, 2
      // Predicated region
      $region25: #{tpu_custom_call.1} parent=5 // pred_check
        %p248 = pneg %p247
      $region26: #{tpu_custom_call.1} parent=5 // pred_check_branch
        %250 = sbr.rel (%p248) target = $region28
      $region27: #{tpu_custom_call.1} parent=5 // pred_region
        // Predicated region
        $region29: #{tpu_custom_call.1} parent=27 // pred_check
          %p251 = pneg %p46
        $region30: #{tpu_custom_call.1} parent=27 // pred_check_branch
          %253 = sbr.rel (%p251) target = $region32
        $region31: #{tpu_custom_call.1} parent=27 // pred_region
          %s254 = sand.u32 %s36, 1
          %s255 = scalar_lea.sflag [#allocation3], %s254
          %s256 = sand.u32 %s36, 1
          %s257 = smul.addr %s256, 64
          %s258 = scalar_lea.vmem [#allocation2], %s257
          %s259 = smul.u32 16, %s26
          %s261 = ssub.s32 1024, 1024
          %262 = vsyncadd %s255, %s261
          %s263 = smul.addr %s259, 64
          %s264 = scalar_lea.hbm %s0, %s263
          %s265 = sshll.u32 %s258, 4
          %s266 = int_to_ptr.vmem [resolvable:$true] %s265
          %271 = dma.hbm_to_vmem [thread:$0]  %s264, 1024, %s266, %s255, 64, 64, 4
        $region32: #{tpu_custom_call.1} parent=27 // pred_fallthru
          _
        // Predicated region
        $region33: #{tpu_custom_call.1} parent=27 // pred_check
          %p272 = pneg %p72
        $region34: #{tpu_custom_call.1} parent=27 // pred_check_branch
          %274 = sbr.rel (%p272) target = $region36
        $region35: #{tpu_custom_call.1} parent=27 // pred_region
          %s275 = sand.u32 %s26, 1
          %s276 = scalar_lea.sflag [#allocation6], %s275
          %s277 = sand.u32 %s62, 1
          %s278 = smul.addr %s277, 64
          %s279 = scalar_lea.vmem [#allocation5], %s278
          %s280 = smul.u32 16, %s26
          %s282 = ssub.s32 1024, 1024
          %283 = vsyncadd %s276, %s282
          %s284 = smul.addr %s280, 64
          %s285 = scalar_lea.hbm %s1, %s284
          %s286 = sshll.u32 %s279, 4
          %s287 = int_to_ptr.vmem [resolvable:$true] %s286
          %292 = dma.hbm_to_vmem [thread:$0]  %s285, 1024, %s287, %s276, 64, 64, 4
        $region36: #{tpu_custom_call.1} parent=27 // pred_fallthru
          _
      $region28: #{tpu_custom_call.1} parent=5 // pred_fallthru
        _
      %p293 = scmp.le.s32.totalorder 1, %s26
      %p294 = scmp.lt.s32.totalorder %s26, 3
      %p295 = pnand %p293, %p294
      %p296 = pneg %p295
      // Predicated region
      $region37: #{tpu_custom_call.1} parent=5 // pred_check
        _
      $region38: #{tpu_custom_call.1} parent=5 // pred_check_branch
        %298 = sbr.rel (%p295) target = $region40
      $region39: #{tpu_custom_call.1} parent=5 // pred_region
        %s299 = ssub.s32 %s26, 1
        %s300 = sand.u32 %s39, 1
        %s301 = scalar_lea.sflag [#allocation3], %s300
        %s302 = sand.u32 %s39, 1
        %s303 = smul.addr %s302, 64
        %s304 = scalar_lea.vmem [#allocation2], %s303
        // Predicated region
        $region41: #{tpu_custom_call.1} parent=39 // pred_check
          %p305 = pneg %p52
        $region42: #{tpu_custom_call.1} parent=39 // pred_check_branch
          %307 = sbr.rel (%p305) target = $region44
        $region43: #{tpu_custom_call.1} parent=39 // pred_region
          %308 = dma.done %s301, 1024
        $region44: #{tpu_custom_call.1} parent=39 // pred_fallthru
          _
        %s309 = sand.u32 %s31, 1
        %s310 = scalar_lea.sflag [#allocation6], %s309
        %s311 = sand.u32 %s65, 1
        %s312 = smul.addr %s311, 64
        %s313 = scalar_lea.vmem [#allocation5], %s312
        // Predicated region
        $region45: #{tpu_custom_call.1} parent=39 // pred_check
          %p314 = pneg %p78
        $region46: #{tpu_custom_call.1} parent=39 // pred_check_branch
          %316 = sbr.rel (%p314) target = $region48
        $region47: #{tpu_custom_call.1} parent=39 // pred_region
          %317 = dma.done %s310, 1024
        $region48: #{tpu_custom_call.1} parent=39 // pred_fallthru
          _
        // Predicated region
        $region49: #{tpu_custom_call.1} parent=39 // pred_check
          %p318 = pneg %p99
        $region50: #{tpu_custom_call.1} parent=39 // pred_check_branch
          %320 = sbr.rel (%p318) target = $region52
        $region51: #{tpu_custom_call.1} parent=39 // pred_region
          %321 = dma.done [#allocation6], 2048
        $region52: #{tpu_custom_call.1} parent=39 // pred_fallthru
          _
        // Predicated region
        $region53: #{tpu_custom_call.1} parent=39 // pred_check
          %p322 = pneg %p120
        $region54: #{tpu_custom_call.1} parent=39 // pred_check_branch
          %324 = sbr.rel (%p322) target = $region56
        $region55: #{tpu_custom_call.1} parent=39 // pred_region
          %325 = dma.done [#allocation9], 2048
        $region56: #{tpu_custom_call.1} parent=39 // pred_fallthru
          _
        // Predicated region
        $region57: #{tpu_custom_call.1} parent=39 // pred_check
          %p326 = pneg %p141
        $region58: #{tpu_custom_call.1} parent=39 // pred_check_branch
          %328 = sbr.rel (%p326) target = $region60
        $region59: #{tpu_custom_call.1} parent=39 // pred_region
          %329 = dma.done [#allocation9], 6144
        $region60: #{tpu_custom_call.1} parent=39 // pred_fallthru
          _
        %s330 = sand.u32 %s39, 1
        %s331 = scalar_lea.sflag [#allocation3], %s330
        %s332 = sand.u32 %s39, 1
        %s333 = smul.addr %s332, 64
        %s334 = scalar_lea.vmem [#allocation2], %s333
        %p335 = pneg %p52
        %p336 = pneg %p49
        %s337 = sand.u32 %s31, 1
        %s338 = scalar_lea.sflag [#allocation6], %s337
        %s339 = sand.u32 %s65, 1
        %s340 = smul.addr %s339, 64
        %s341 = scalar_lea.vmem [#allocation5], %s340
        %p342 = pneg %p78
        %p343 = pneg %p75
        %p344 = pneg %p99
        %p345 = pneg %p96
        %p346 = pneg %p120
        %p347 = pneg %p117
        %p348 = pneg %p141
        %p349 = pneg %p138
        %p350 = pneg %p167
        %p351 = pneg %p164
        %s352 = sand.u32 %s154, 1
        %s353 = scalar_lea.sflag [#allocation4], %s352
        %s354 = sand.u32 %s154, 1
        %s355 = smul.addr %s354, 64
        %s356 = scalar_lea.vmem [#allocation11], %s355
        %p357 = pneg %p193
        %p358 = pneg %p190
        %s359 = sand.u32 %s180, 1
        %s360 = scalar_lea.sflag [#allocation13], %s359
        %s361 = sand.u32 %s180, 1
        %s362 = smul.addr %s361, 64
        %s363 = scalar_lea.vmem [#allocation12], %s362
        %s364 = smul.u32 16, %s31
        %s365 = smul.u32 16, %s31
        %s366 = smul.u32 16, %s31
        %s367 = smul.u32 16, %s31
        %v369 = vld [vmem:[%s304] sm:$0xf]
        %v370 = vld [vmem:[%s304 + $0x4] sm:$0xf]
        %v371 = vld [vmem:[%s304 + $0x8] sm:$0xf]
        %v372 = vld [vmem:[%s304 + $0xc] sm:$0xf]
        %v373 = vld [vmem:[%s304 + $0x10] sm:$0xf]
        %v374 = vld [vmem:[%s304 + $0x14] sm:$0xf]
        %v375 = vld [vmem:[%s304 + $0x18] sm:$0xf]
        %v376 = vld [vmem:[%s304 + $0x1c] sm:$0xf]
        %v377 = vld [vmem:[%s304 + $0x20] sm:$0xf]
        %v378 = vld [vmem:[%s304 + $0x24] sm:$0xf]
        %v379 = vld [vmem:[%s304 + $0x28] sm:$0xf]
        %v380 = vld [vmem:[%s304 + $0x2c] sm:$0xf]
        %v381 = vld [vmem:[%s304 + $0x30] sm:$0xf]
        %v382 = vld [vmem:[%s304 + $0x34] sm:$0xf]
        %v383 = vld [vmem:[%s304 + $0x38] sm:$0xf]
        %v384 = vld [vmem:[%s304 + $0x3c] sm:$0xf]
        %v385 = vld [vmem:[%s313] sm:$0xf]
        %v386 = vld [vmem:[%s313 + $0x4] sm:$0xf]
        %v387 = vld [vmem:[%s313 + $0x8] sm:$0xf]
        %v388 = vld [vmem:[%s313 + $0xc] sm:$0xf]
        %v389 = vld [vmem:[%s313 + $0x10] sm:$0xf]
        %v390 = vld [vmem:[%s313 + $0x14] sm:$0xf]
        %v391 = vld [vmem:[%s313 + $0x18] sm:$0xf]
        %v392 = vld [vmem:[%s313 + $0x1c] sm:$0xf]
        %v393 = vld [vmem:[%s313 + $0x20] sm:$0xf]
        %v394 = vld [vmem:[%s313 + $0x24] sm:$0xf]
        %v395 = vld [vmem:[%s313 + $0x28] sm:$0xf]
        %v396 = vld [vmem:[%s313 + $0x2c] sm:$0xf]
        %v397 = vld [vmem:[%s313 + $0x30] sm:$0xf]
        %v398 = vld [vmem:[%s313 + $0x34] sm:$0xf]
        %v399 = vld [vmem:[%s313 + $0x38] sm:$0xf]
        %v400 = vld [vmem:[%s313 + $0x3c] sm:$0xf]
        %v401 = vld [vmem:[#allocation7] sm:$0xf]
        %v402 = vld [vmem:[#allocation7 + $0x4] sm:$0xf]
        %v403 = vld [vmem:[#allocation7 + $0x8] sm:$0xf]
        %v404 = vld [vmem:[#allocation7 + $0xc] sm:$0xf]
        %v405 = vld [vmem:[#allocation7 + $0x10] sm:$0xf]
        %v406 = vld [vmem:[#allocation7 + $0x14] sm:$0xf]
        %v407 = vld [vmem:[#allocation7 + $0x18] sm:$0xf]
        %v408 = vld [vmem:[#allocation7 + $0x1c] sm:$0xf]
        %v409 = vld [vmem:[#allocation7 + $0x20] sm:$0xf]
        %v410 = vld [vmem:[#allocation7 + $0x24] sm:$0xf]
        %v411 = vld [vmem:[#allocation7 + $0x28] sm:$0xf]
        %v412 = vld [vmem:[#allocation7 + $0x2c] sm:$0xf]
        %v413 = vld [vmem:[#allocation7 + $0x30] sm:$0xf]
        %v414 = vld [vmem:[#allocation7 + $0x34] sm:$0xf]
        %v415 = vld [vmem:[#allocation7 + $0x38] sm:$0xf]
        %v416 = vld [vmem:[#allocation7 + $0x3c] sm:$0xf]
        %v417 = vld [vmem:[#allocation7 + $0x40] sm:$0xf]
        %v418 = vld [vmem:[#allocation7 + $0x44] sm:$0xf]
        %v419 = vld [vmem:[#allocation7 + $0x48] sm:$0xf]
        %v420 = vld [vmem:[#allocation7 + $0x4c] sm:$0xf]
        %v421 = vld [vmem:[#allocation7 + $0x50] sm:$0xf]
        %v422 = vld [vmem:[#allocation7 + $0x54] sm:$0xf]
        %v423 = vld [vmem:[#allocation7 + $0x58] sm:$0xf]
        %v424 = vld [vmem:[#allocation7 + $0x5c] sm:$0xf]
        %v425 = vld [vmem:[#allocation7 + $0x60] sm:$0xf]
        %v426 = vld [vmem:[#allocation7 + $0x64] sm:$0xf]
        %v427 = vld [vmem:[#allocation7 + $0x68] sm:$0xf]
        %v428 = vld [vmem:[#allocation7 + $0x6c] sm:$0xf]
        %v429 = vld [vmem:[#allocation7 + $0x70] sm:$0xf]
        %v430 = vld [vmem:[#allocation7 + $0x74] sm:$0xf]
        %v431 = vld [vmem:[#allocation7 + $0x78] sm:$0xf]
        %v432 = vld [vmem:[#allocation7 + $0x7c] sm:$0xf]
        %v449 = vunpack.c.l.b16 %v385
        %v450 = vunpack.c.l.b16 %v386
        %v451 = vunpack.c.l.b16 %v387
        %v452 = vunpack.c.l.b16 %v388
        %v453 = vunpack.c.l.b16 %v389
        %v454 = vunpack.c.l.b16 %v390
        %v455 = vunpack.c.l.b16 %v391
        %v456 = vunpack.c.l.b16 %v392
        %v457 = vunpack.c.l.b16 %v393
        %v458 = vunpack.c.l.b16 %v394
        %v459 = vunpack.c.l.b16 %v395
        %v460 = vunpack.c.l.b16 %v396
        %v461 = vunpack.c.l.b16 %v397
        %v462 = vunpack.c.l.b16 %v398
        %v463 = vunpack.c.l.b16 %v399
        %v464 = vunpack.c.l.b16 %v400
        %v465 = vpack.c.b16 %v450, %v449
        %v466 = vpack.c.b16 %v452, %v451
        %v467 = vpack.c.b16 %v454, %v453
        %v468 = vpack.c.b16 %v456, %v455
        %v469 = vpack.c.b16 %v458, %v457
        %v470 = vpack.c.b16 %v460, %v459
        %v471 = vpack.c.b16 %v462, %v461
        %v472 = vpack.c.b16 %v464, %v463
        %v497 = vunpack.c.l.b16 %v417
        %v498 = vunpack.c.l.b16 %v418
        %v499 = vunpack.c.l.b16 %v419
        %v500 = vunpack.c.l.b16 %v420
        %v501 = vunpack.c.l.b16 %v421
        %v502 = vunpack.c.l.b16 %v422
        %v503 = vunpack.c.l.b16 %v423
        %v504 = vunpack.c.l.b16 %v424
        %v505 = vunpack.c.l.b16 %v425
        %v506 = vunpack.c.l.b16 %v426
        %v507 = vunpack.c.l.b16 %v427
        %v508 = vunpack.c.l.b16 %v428
        %v509 = vunpack.c.l.b16 %v429
        %v510 = vunpack.c.l.b16 %v430
        %v511 = vunpack.c.l.b16 %v431
        %v512 = vunpack.c.l.b16 %v432
        %v513 = vpack.c.b16 %v498, %v497
        %v514 = vpack.c.b16 %v500, %v499
        %v515 = vpack.c.b16 %v502, %v501
        %v516 = vpack.c.b16 %v504, %v503
        %v517 = vpack.c.b16 %v506, %v505
        %v518 = vpack.c.b16 %v508, %v507
        %v519 = vpack.c.b16 %v510, %v509
        %v520 = vpack.c.b16 %v512, %v511
        %529 = vmatprep.subr.bf16.mxu0 0
        %530 = vmatpush1.bf16.msra.mxu0 %v513
        %531 = vmatprep.subr.bf16.mxu0 0
        %532 = vmatpush1.bf16.msra.mxu0 %v514
        %533 = vmatprep.subr.bf16.mxu0 0
        %534 = vmatpush1.bf16.msra.mxu0 %v515
        %535 = vmatprep.subr.bf16.mxu0 0
        %536 = vmatpush1.bf16.msra.mxu0 %v516
        %537 = vmatprep.subr.bf16.mxu0 0
        %538 = vmatpush1.bf16.msra.mxu0 %v517
        %539 = vmatprep.subr.bf16.mxu0 0
        %540 = vmatpush1.bf16.msra.mxu0 %v518
        %541 = vmatprep.subr.bf16.mxu0 0
        %542 = vmatpush1.bf16.msra.mxu0 %v519
        %543 = vmatprep.subr.bf16.mxu0 0
        %544 = vmatpush1.bf16.msra.mxu0 %v520
        %545 = vmatprep.subr.bf16.mxu0 0
        %546 = vmatpush1.bf16.msra.mxu0 0
        %547 = vmatprep.subr.bf16.mxu0 0
        %548 = vmatpush1.bf16.msra.mxu0 0
        %549 = vmatprep.subr.bf16.mxu0 0
        %550 = vmatpush1.bf16.msra.mxu0 0
        %551 = vmatprep.subr.bf16.mxu0 0
        %552 = vmatpush1.bf16.msra.mxu0 0
        %553 = vmatprep.subr.bf16.mxu0 0
        %554 = vmatpush1.bf16.msra.mxu0 0
        %555 = vmatprep.subr.bf16.mxu0 0
        %556 = vmatpush1.bf16.msra.mxu0 0
        %557 = vmatprep.subr.bf16.mxu0 0
        %558 = vmatpush1.bf16.msra.mxu0 0
        %559 = vmatprep.subr.bf16.mxu0 0
        %560 = vmatpush1.bf16.msra.mxu0 0
        %561 = vmatprep.mubr.bf16.mxu0 0
        %562 = vmatmul.mubr.bf16.gmra.mrb[0].mxu0 %v465
        %v563 = vpop.f32.mrb[0].mxu0
        %v564 = vadd.f32 0.0, %v563
        %v565 = vpop.f32.mrb[0].mxu0
        %v566 = vpop.f32.mrb[0].mxu0
        %v567 = vadd.f32 0.0, %v566
        %v568 = vpop.f32.mrb[0].mxu0
        %569 = vmatprep.mubr.bf16.mxu0 0
        %570 = vmatmul.mubr.bf16.gmra.mrb[0].mxu0 %v466
        %v571 = vpop.f32.mrb[0].mxu0
        %v572 = vadd.f32 0.0, %v571
        %v573 = vpop.f32.mrb[0].mxu0
        %v574 = vpop.f32.mrb[0].mxu0
        %v575 = vadd.f32 0.0, %v574
        %v576 = vpop.f32.mrb[0].mxu0
        %577 = vmatprep.mubr.bf16.mxu0 0
        %578 = vmatmul.mubr.bf16.gmra.mrb[0].mxu0 %v467
        %v579 = vpop.f32.mrb[0].mxu0
        %v580 = vadd.f32 0.0, %v579
        %v581 = vpop.f32.mrb[0].mxu0
        %v582 = vpop.f32.mrb[0].mxu0
        %v583 = vadd.f32 0.0, %v582
        %v584 = vpop.f32.mrb[0].mxu0
        %585 = vmatprep.mubr.bf16.mxu0 0
        %586 = vmatmul.mubr.bf16.gmra.mrb[0].mxu0 %v468
        %v587 = vpop.f32.mrb[0].mxu0
        %v588 = vadd.f32 0.0, %v587
        %v589 = vpop.f32.mrb[0].mxu0
        %v590 = vpop.f32.mrb[0].mxu0
        %v591 = vadd.f32 0.0, %v590
        %v592 = vpop.f32.mrb[0].mxu0
        %593 = vmatprep.mubr.bf16.mxu0 0
        %594 = vmatmul.mubr.bf16.gmra.mrb[0].mxu0 %v469
        %v595 = vpop.f32.mrb[0].mxu0
        %v596 = vadd.f32 0.0, %v595
        %v597 = vpop.f32.mrb[0].mxu0
        %v598 = vpop.f32.mrb[0].mxu0
        %v599 = vadd.f32 0.0, %v598
        %v600 = vpop.f32.mrb[0].mxu0
        %601 = vmatprep.mubr.bf16.mxu0 0
        %602 = vmatmul.mubr.bf16.gmra.mrb[0].mxu0 %v470
        %v603 = vpop.f32.mrb[0].mxu0
        %v604 = vadd.f32 0.0, %v603
        %v605 = vpop.f32.mrb[0].mxu0
        %v606 = vpop.f32.mrb[0].mxu0
        %v607 = vadd.f32 0.0, %v606
        %v608 = vpop.f32.mrb[0].mxu0
        %609 = vmatprep.mubr.bf16.mxu0 0
        %610 = vmatmul.mubr.bf16.gmra.mrb[0].mxu0 %v471
        %v611 = vpop.f32.mrb[0].mxu0
        %v612 = vadd.f32 0.0, %v611
        %v613 = vpop.f32.mrb[0].mxu0
        %v614 = vpop.f32.mrb[0].mxu0
        %v615 = vadd.f32 0.0, %v614
        %v616 = vpop.f32.mrb[0].mxu0
        %617 = vmatprep.mubr.bf16.mxu0 0
        %618 = vmatmul.mubr.bf16.gmra.mrb[0].mxu0 %v472
        %v619 = vpop.f32.mrb[0].mxu0
        %v620 = vadd.f32 0.0, %v619
        %v621 = vpop.f32.mrb[0].mxu0
        %v622 = vpop.f32.mrb[0].mxu0
        %v623 = vadd.f32 0.0, %v622
        %v624 = vpop.f32.mrb[0].mxu0
        %625 = vdwg.mxu0
        %v642 = vunpack.c.l.b16 %v369
        %v643 = vunpack.c.l.b16 %v370
        %v644 = vunpack.c.l.b16 %v371
        %v645 = vunpack.c.l.b16 %v372
        %v646 = vunpack.c.l.b16 %v373
        %v647 = vunpack.c.l.b16 %v374
        %v648 = vunpack.c.l.b16 %v375
        %v649 = vunpack.c.l.b16 %v376
        %v650 = vunpack.c.l.b16 %v377
        %v651 = vunpack.c.l.b16 %v378
        %v652 = vunpack.c.l.b16 %v379
        %v653 = vunpack.c.l.b16 %v380
        %v654 = vunpack.c.l.b16 %v381
        %v655 = vunpack.c.l.b16 %v382
        %v656 = vunpack.c.l.b16 %v383
        %v657 = vunpack.c.l.b16 %v384
        %v658 = vpack.c.b16 %v643, %v642
        %v659 = vpack.c.b16 %v645, %v644
        %v660 = vpack.c.b16 %v647, %v646
        %v661 = vpack.c.b16 %v649, %v648
        %v662 = vpack.c.b16 %v651, %v650
        %v663 = vpack.c.b16 %v653, %v652
        %v664 = vpack.c.b16 %v655, %v654
        %v665 = vpack.c.b16 %v657, %v656
        %v690 = vunpack.c.l.b16 %v401
        %v691 = vunpack.c.l.b16 %v402
        %v692 = vunpack.c.l.b16 %v403
        %v693 = vunpack.c.l.b16 %v404
        %v694 = vunpack.c.l.b16 %v405
        %v695 = vunpack.c.l.b16 %v406
        %v696 = vunpack.c.l.b16 %v407
        %v697 = vunpack.c.l.b16 %v408
        %v698 = vunpack.c.l.b16 %v409
        %v699 = vunpack.c.l.b16 %v410
        %v700 = vunpack.c.l.b16 %v411
        %v701 = vunpack.c.l.b16 %v412
        %v702 = vunpack.c.l.b16 %v413
        %v703 = vunpack.c.l.b16 %v414
        %v704 = vunpack.c.l.b16 %v415
        %v705 = vunpack.c.l.b16 %v416
        %v706 = vpack.c.b16 %v691, %v690
        %v707 = vpack.c.b16 %v693, %v692
        %v708 = vpack.c.b16 %v695, %v694
        %v709 = vpack.c.b16 %v697, %v696
        %v710 = vpack.c.b16 %v699, %v698
        %v711 = vpack.c.b16 %v701, %v700
        %v712 = vpack.c.b16 %v703, %v702
        %v713 = vpack.c.b16 %v705, %v704
        %722 = vmatprep.subr.bf16.mxu0 0
        %723 = vmatpush1.bf16.msra.mxu0 %v706
        %724 = vmatprep.subr.bf16.mxu0 0
        %725 = vmatpush1.bf16.msra.mxu0 %v707
        %726 = vmatprep.subr.bf16.mxu0 0
        %727 = vmatpush1.bf16.msra.mxu0 %v708
        %728 = vmatprep.subr.bf16.mxu0 0
        %729 = vmatpush1.bf16.msra.mxu0 %v709
        %730 = vmatprep.subr.bf16.mxu0 0
        %731 = vmatpush1.bf16.msra.mxu0 %v710
        %732 = vmatprep.subr.bf16.mxu0 0
        %733 = vmatpush1.bf16.msra.mxu0 %v711
        %734 = vmatprep.subr.bf16.mxu0 0
        %735 = vmatpush1.bf16.msra.mxu0 %v712
        %736 = vmatprep.subr.bf16.mxu0 0
        %737 = vmatpush1.bf16.msra.mxu0 %v713
        %738 = vmatprep.subr.bf16.mxu0 0
        %739 = vmatpush1.bf16.msra.mxu0 0
        %740 = vmatprep.subr.bf16.mxu0 0
        %741 = vmatpush1.bf16.msra.mxu0 0
        %742 = vmatprep.subr.bf16.mxu0 0
        %743 = vmatpush1.bf16.msra.mxu0 0
        %744 = vmatprep.subr.bf16.mxu0 0
        %745 = vmatpush1.bf16.msra.mxu0 0
        %746 = vmatprep.subr.bf16.mxu0 0
        %747 = vmatpush1.bf16.msra.mxu0 0
        %748 = vmatprep.subr.bf16.mxu0 0
        %749 = vmatpush1.bf16.msra.mxu0 0
        %750 = vmatprep.subr.bf16.mxu0 0
        %751 = vmatpush1.bf16.msra.mxu0 0
        %752 = vmatprep.subr.bf16.mxu0 0
        %753 = vmatpush1.bf16.msra.mxu0 0
        %754 = vmatprep.mubr.bf16.mxu0 0
        %755 = vmatmul.mubr.bf16.gmra.mrb[0].mxu0 %v658
        %v756 = vpop.f32.mrb[0].mxu0
        %v757 = vadd.f32 %v564, %v756
        %v758 = vpop.f32.mrb[0].mxu0
        %v759 = vpop.f32.mrb[0].mxu0
        %v760 = vadd.f32 %v567, %v759
        %v761 = vpop.f32.mrb[0].mxu0
        %762 = vmatprep.mubr.bf16.mxu0 0
        %763 = vmatmul.mubr.bf16.gmra.mrb[0].mxu0 %v659
        %v764 = vpop.f32.mrb[0].mxu0
        %v765 = vadd.f32 %v572, %v764
        %v766 = vpop.f32.mrb[0].mxu0
        %v767 = vpop.f32.mrb[0].mxu0
        %v768 = vadd.f32 %v575, %v767
        %v769 = vpop.f32.mrb[0].mxu0
        %770 = vmatprep.mubr.bf16.mxu0 0
        %771 = vmatmul.mubr.bf16.gmra.mrb[0].mxu0 %v660
        %v772 = vpop.f32.mrb[0].mxu0
        %v773 = vadd.f32 %v580, %v772
        %v774 = vpop.f32.mrb[0].mxu0
        %v775 = vpop.f32.mrb[0].mxu0
        %v776 = vadd.f32 %v583, %v775
        %v777 = vpop.f32.mrb[0].mxu0
        %778 = vmatprep.mubr.bf16.mxu0 0
        %779 = vmatmul.mubr.bf16.gmra.mrb[0].mxu0 %v661
        %v780 = vpop.f32.mrb[0].mxu0
        %v781 = vadd.f32 %v588, %v780
        %v782 = vpop.f32.mrb[0].mxu0
        %v783 = vpop.f32.mrb[0].mxu0
        %v784 = vadd.f32 %v591, %v783
        %v785 = vpop.f32.mrb[0].mxu0
        %786 = vmatprep.mubr.bf16.mxu0 0
        %787 = vmatmul.mubr.bf16.gmra.mrb[0].mxu0 %v662
        %v788 = vpop.f32.mrb[0].mxu0
        %v789 = vadd.f32 %v596, %v788
        %v790 = vpop.f32.mrb[0].mxu0
        %v791 = vpop.f32.mrb[0].mxu0
        %v792 = vadd.f32 %v599, %v791
        %v793 = vpop.f32.mrb[0].mxu0
        %794 = vmatprep.mubr.bf16.mxu0 0
        %795 = vmatmul.mubr.bf16.gmra.mrb[0].mxu0 %v663
        %v796 = vpop.f32.mrb[0].mxu0
        %v797 = vadd.f32 %v604, %v796
        %v798 = vpop.f32.mrb[0].mxu0
        %v799 = vpop.f32.mrb[0].mxu0
        %v800 = vadd.f32 %v607, %v799
        %v801 = vpop.f32.mrb[0].mxu0
        %802 = vmatprep.mubr.bf16.mxu0 0
        %803 = vmatmul.mubr.bf16.gmra.mrb[0].mxu0 %v664
        %v804 = vpop.f32.mrb[0].mxu0
        %v805 = vadd.f32 %v612, %v804
        %v806 = vpop.f32.mrb[0].mxu0
        %v807 = vpop.f32.mrb[0].mxu0
        %v808 = vadd.f32 %v615, %v807
        %v809 = vpop.f32.mrb[0].mxu0
        %810 = vmatprep.mubr.bf16.mxu0 0
        %811 = vmatmul.mubr.bf16.gmra.mrb[0].mxu0 %v665
        %v812 = vpop.f32.mrb[0].mxu0
        %v813 = vadd.f32 %v620, %v812
        %v814 = vpop.f32.mrb[0].mxu0
        %v815 = vpop.f32.mrb[0].mxu0
        %v816 = vadd.f32 %v623, %v815
        %v817 = vpop.f32.mrb[0].mxu0
        %818 = vdwg.mxu0
        %v819 = vtanh.pop %v757
        %v820 = vtanh.pop %v760
        %v821 = vtanh.pop %v765
        %v822 = vtanh.pop %v768
        %v823 = vtanh.pop %v773
        %v824 = vtanh.pop %v776
        %v825 = vtanh.pop %v781
        %v826 = vtanh.pop %v784
        %v827 = vtanh.pop %v789
        %v828 = vtanh.pop %v792
        %v829 = vtanh.pop %v797
        %v830 = vtanh.pop %v800
        %v831 = vtanh.pop %v805
        %v832 = vtanh.pop %v808
        %v833 = vtanh.pop %v813
        %v834 = vtanh.pop %v816
        %v835 = vpack.c.bf16 %v820, %v819
        %v836 = vpack.c.bf16 %v822, %v821
        %v837 = vpack.c.bf16 %v824, %v823
        %v838 = vpack.c.bf16 %v826, %v825
        %v839 = vpack.c.bf16 %v828, %v827
        %v840 = vpack.c.bf16 %v830, %v829
        %v841 = vpack.c.bf16 %v832, %v831
        %v842 = vpack.c.bf16 %v834, %v833
        %v843 = vld [vmem:[#allocation8] sm:$0xf]
        %v844 = vld [vmem:[#allocation8 + $0x4] sm:$0xf]
        %v845 = vld [vmem:[#allocation8 + $0x8] sm:$0xf]
        %v846 = vld [vmem:[#allocation8 + $0xc] sm:$0xf]
        %v847 = vld [vmem:[#allocation8 + $0x10] sm:$0xf]
        %v848 = vld [vmem:[#allocation8 + $0x14] sm:$0xf]
        %v849 = vld [vmem:[#allocation8 + $0x18] sm:$0xf]
        %v850 = vld [vmem:[#allocation8 + $0x1c] sm:$0xf]
        %v851 = vld [vmem:[#allocation8 + $0x20] sm:$0xf]
        %v852 = vld [vmem:[#allocation8 + $0x24] sm:$0xf]
        %v853 = vld [vmem:[#allocation8 + $0x28] sm:$0xf]
        %v854 = vld [vmem:[#allocation8 + $0x2c] sm:$0xf]
        %v855 = vld [vmem:[#allocation8 + $0x30] sm:$0xf]
        %v856 = vld [vmem:[#allocation8 + $0x34] sm:$0xf]
        %v857 = vld [vmem:[#allocation8 + $0x38] sm:$0xf]
        %v858 = vld [vmem:[#allocation8 + $0x3c] sm:$0xf]
        %v859 = vld [vmem:[#allocation8 + $0x40] sm:$0xf]
        %v860 = vld [vmem:[#allocation8 + $0x44] sm:$0xf]
        %v861 = vld [vmem:[#allocation8 + $0x48] sm:$0xf]
        %v862 = vld [vmem:[#allocation8 + $0x4c] sm:$0xf]
        %v863 = vld [vmem:[#allocation8 + $0x50] sm:$0xf]
        %v864 = vld [vmem:[#allocation8 + $0x54] sm:$0xf]
        %v865 = vld [vmem:[#allocation8 + $0x58] sm:$0xf]
        %v866 = vld [vmem:[#allocation8 + $0x5c] sm:$0xf]
        %v867 = vld [vmem:[#allocation8 + $0x60] sm:$0xf]
        %v868 = vld [vmem:[#allocation8 + $0x64] sm:$0xf]
        %v869 = vld [vmem:[#allocation8 + $0x68] sm:$0xf]
        %v870 = vld [vmem:[#allocation8 + $0x6c] sm:$0xf]
        %v871 = vld [vmem:[#allocation8 + $0x70] sm:$0xf]
        %v872 = vld [vmem:[#allocation8 + $0x74] sm:$0xf]
        %v873 = vld [vmem:[#allocation8 + $0x78] sm:$0xf]
        %v874 = vld [vmem:[#allocation8 + $0x7c] sm:$0xf]
        %v891 = vunpack.c.l.b16 %v859
        %v892 = vunpack.c.l.b16 %v860
        %v893 = vunpack.c.l.b16 %v861
        %v894 = vunpack.c.l.b16 %v862
        %v895 = vunpack.c.l.b16 %v863
        %v896 = vunpack.c.l.b16 %v864
        %v897 = vunpack.c.l.b16 %v865
        %v898 = vunpack.c.l.b16 %v866
        %v899 = vunpack.c.l.b16 %v867
        %v900 = vunpack.c.l.b16 %v868
        %v901 = vunpack.c.l.b16 %v869
        %v902 = vunpack.c.l.b16 %v870
        %v903 = vunpack.c.l.b16 %v871
        %v904 = vunpack.c.l.b16 %v872
        %v905 = vunpack.c.l.b16 %v873
        %v906 = vunpack.c.l.b16 %v874
        %v907 = vpack.c.b16 %v892, %v891
        %v908 = vpack.c.b16 %v894, %v893
        %v909 = vpack.c.b16 %v896, %v895
        %v910 = vpack.c.b16 %v898, %v897
        %v911 = vpack.c.b16 %v900, %v899
        %v912 = vpack.c.b16 %v902, %v901
        %v913 = vpack.c.b16 %v904, %v903
        %v914 = vpack.c.b16 %v906, %v905
        %923 = vmatprep.subr.bf16.mxu0 0
        %924 = vmatpush1.bf16.msra.mxu0 %v907
        %925 = vmatprep.subr.bf16.mxu0 0
        %926 = vmatpush1.bf16.msra.mxu0 %v908
        %927 = vmatprep.subr.bf16.mxu0 0
        %928 = vmatpush1.bf16.msra.mxu0 %v909
        %929 = vmatprep.subr.bf16.mxu0 0
        %930 = vmatpush1.bf16.msra.mxu0 %v910
        %931 = vmatprep.subr.bf16.mxu0 0
        %932 = vmatpush1.bf16.msra.mxu0 %v911
        %933 = vmatprep.subr.bf16.mxu0 0
        %934 = vmatpush1.bf16.msra.mxu0 %v912
        %935 = vmatprep.subr.bf16.mxu0 0
        %936 = vmatpush1.bf16.msra.mxu0 %v913
        %937 = vmatprep.subr.bf16.mxu0 0
        %938 = vmatpush1.bf16.msra.mxu0 %v914
        %939 = vmatprep.subr.bf16.mxu0 0
        %940 = vmatpush1.bf16.msra.mxu0 0
        %941 = vmatprep.subr.bf16.mxu0 0
        %942 = vmatpush1.bf16.msra.mxu0 0
        %943 = vmatprep.subr.bf16.mxu0 0
        %944 = vmatpush1.bf16.msra.mxu0 0
        %945 = vmatprep.subr.bf16.mxu0 0
        %946 = vmatpush1.bf16.msra.mxu0 0
        %947 = vmatprep.subr.bf16.mxu0 0
        %948 = vmatpush1.bf16.msra.mxu0 0
        %949 = vmatprep.subr.bf16.mxu0 0
        %950 = vmatpush1.bf16.msra.mxu0 0
        %951 = vmatprep.subr.bf16.mxu0 0
        %952 = vmatpush1.bf16.msra.mxu0 0
        %953 = vmatprep.subr.bf16.mxu0 0
        %954 = vmatpush1.bf16.msra.mxu0 0
        %955 = vmatprep.mubr.bf16.mxu0 0
        %956 = vmatmul.mubr.bf16.gmra.mrb[0].mxu0 %v835
        %v957 = vpop.f32.mrb[0].mxu0
        %v958 = vadd.f32 0.0, %v957
        %v959 = vpop.f32.mrb[0].mxu0
        %v960 = vpop.f32.mrb[0].mxu0
        %v961 = vadd.f32 0.0, %v960
        %v962 = vpop.f32.mrb[0].mxu0
        %963 = vmatprep.mubr.bf16.mxu0 0
        %964 = vmatmul.mubr.bf16.gmra.mrb[0].mxu0 %v836
        %v965 = vpop.f32.mrb[0].mxu0
        %v966 = vadd.f32 0.0, %v965
        %v967 = vpop.f32.mrb[0].mxu0
        %v968 = vpop.f32.mrb[0].mxu0
        %v969 = vadd.f32 0.0, %v968
        %v970 = vpop.f32.mrb[0].mxu0
        %971 = vmatprep.mubr.bf16.mxu0 0
        %972 = vmatmul.mubr.bf16.gmra.mrb[0].mxu0 %v837
        %v973 = vpop.f32.mrb[0].mxu0
        %v974 = vadd.f32 0.0, %v973
        %v975 = vpop.f32.mrb[0].mxu0
        %v976 = vpop.f32.mrb[0].mxu0
        %v977 = vadd.f32 0.0, %v976
        %v978 = vpop.f32.mrb[0].mxu0
        %979 = vmatprep.mubr.bf16.mxu0 0
        %980 = vmatmul.mubr.bf16.gmra.mrb[0].mxu0 %v838
        %v981 = vpop.f32.mrb[0].mxu0
        %v982 = vadd.f32 0.0, %v981
        %v983 = vpop.f32.mrb[0].mxu0
        %v984 = vpop.f32.mrb[0].mxu0
        %v985 = vadd.f32 0.0, %v984
        %v986 = vpop.f32.mrb[0].mxu0
        %987 = vmatprep.mubr.bf16.mxu0 0
        %988 = vmatmul.mubr.bf16.gmra.mrb[0].mxu0 %v839
        %v989 = vpop.f32.mrb[0].mxu0
        %v990 = vadd.f32 0.0, %v989
        %v991 = vpop.f32.mrb[0].mxu0
        %v992 = vpop.f32.mrb[0].mxu0
        %v993 = vadd.f32 0.0, %v992
        %v994 = vpop.f32.mrb[0].mxu0
        %995 = vmatprep.mubr.bf16.mxu0 0
        %996 = vmatmul.mubr.bf16.gmra.mrb[0].mxu0 %v840
        %v997 = vpop.f32.mrb[0].mxu0
        %v998 = vadd.f32 0.0, %v997
        %v999 = vpop.f32.mrb[0].mxu0
        %v1000 = vpop.f32.mrb[0].mxu0
        %v1001 = vadd.f32 0.0, %v1000
        %v1002 = vpop.f32.mrb[0].mxu0
        %1003 = vmatprep.mubr.bf16.mxu0 0
        %1004 = vmatmul.mubr.bf16.gmra.mrb[0].mxu0 %v841
        %v1005 = vpop.f32.mrb[0].mxu0
        %v1006 = vadd.f32 0.0, %v1005
        %v1007 = vpop.f32.mrb[0].mxu0
        %v1008 = vpop.f32.mrb[0].mxu0
        %v1009 = vadd.f32 0.0, %v1008
        %v1010 = vpop.f32.mrb[0].mxu0
        %1011 = vmatprep.mubr.bf16.mxu0 0
        %1012 = vmatmul.mubr.bf16.gmra.mrb[0].mxu0 %v842
        %v1013 = vpop.f32.mrb[0].mxu0
        %v1014 = vadd.f32 0.0, %v1013
        %v1015 = vpop.f32.mrb[0].mxu0
        %v1016 = vpop.f32.mrb[0].mxu0
        %v1017 = vadd.f32 0.0, %v1016
        %v1018 = vpop.f32.mrb[0].mxu0
        %1019 = vdwg.mxu0
        %v1036 = vunpack.c.l.b16 %v843
        %v1037 = vunpack.c.l.b16 %v844
        %v1038 = vunpack.c.l.b16 %v845
        %v1039 = vunpack.c.l.b16 %v846
        %v1040 = vunpack.c.l.b16 %v847
        %v1041 = vunpack.c.l.b16 %v848
        %v1042 = vunpack.c.l.b16 %v849
        %v1043 = vunpack.c.l.b16 %v850
        %v1044 = vunpack.c.l.b16 %v851
        %v1045 = vunpack.c.l.b16 %v852
        %v1046 = vunpack.c.l.b16 %v853
        %v1047 = vunpack.c.l.b16 %v854
        %v1048 = vunpack.c.l.b16 %v855
        %v1049 = vunpack.c.l.b16 %v856
        %v1050 = vunpack.c.l.b16 %v857
        %v1051 = vunpack.c.l.b16 %v858
        %v1052 = vpack.c.b16 %v1037, %v1036
        %v1053 = vpack.c.b16 %v1039, %v1038
        %v1054 = vpack.c.b16 %v1041, %v1040
        %v1055 = vpack.c.b16 %v1043, %v1042
        %v1056 = vpack.c.b16 %v1045, %v1044
        %v1057 = vpack.c.b16 %v1047, %v1046
        %v1058 = vpack.c.b16 %v1049, %v1048
        %v1059 = vpack.c.b16 %v1051, %v1050
        %1068 = vmatprep.subr.bf16.mxu0 0
        %1069 = vmatpush1.bf16.msra.mxu0 %v1052
        %1070 = vmatprep.subr.bf16.mxu0 0
        %1071 = vmatpush1.bf16.msra.mxu0 %v1053
        %1072 = vmatprep.subr.bf16.mxu0 0
        %1073 = vmatpush1.bf16.msra.mxu0 %v1054
        %1074 = vmatprep.subr.bf16.mxu0 0
        %1075 = vmatpush1.bf16.msra.mxu0 %v1055
        %1076 = vmatprep.subr.bf16.mxu0 0
        %1077 = vmatpush1.bf16.msra.mxu0 %v1056
        %1078 = vmatprep.subr.bf16.mxu0 0
        %1079 = vmatpush1.bf16.msra.mxu0 %v1057
        %1080 = vmatprep.subr.bf16.mxu0 0
        %1081 = vmatpush1.bf16.msra.mxu0 %v1058
        %1082 = vmatprep.subr.bf16.mxu0 0
        %1083 = vmatpush1.bf16.msra.mxu0 %v1059
        %1084 = vmatprep.subr.bf16.mxu0 0
        %1085 = vmatpush1.bf16.msra.mxu0 0
        %1086 = vmatprep.subr.bf16.mxu0 0
        %1087 = vmatpush1.bf16.msra.mxu0 0
        %1088 = vmatprep.subr.bf16.mxu0 0
        %1089 = vmatpush1.bf16.msra.mxu0 0
        %1090 = vmatprep.subr.bf16.mxu0 0
        %1091 = vmatpush1.bf16.msra.mxu0 0
        %1092 = vmatprep.subr.bf16.mxu0 0
        %1093 = vmatpush1.bf16.msra.mxu0 0
        %1094 = vmatprep.subr.bf16.mxu0 0
        %1095 = vmatpush1.bf16.msra.mxu0 0
        %1096 = vmatprep.subr.bf16.mxu0 0
        %1097 = vmatpush1.bf16.msra.mxu0 0
        %1098 = vmatprep.subr.bf16.mxu0 0
        %1099 = vmatpush1.bf16.msra.mxu0 0
        %1100 = vmatprep.mubr.bf16.mxu0 0
        %1101 = vmatmul.mubr.bf16.gmra.mrb[0].mxu0 %v658
        %v1102 = vpop.f32.mrb[0].mxu0
        %v1103 = vadd.f32 %v958, %v1102
        %v1104 = vpop.f32.mrb[0].mxu0
        %v1105 = vpop.f32.mrb[0].mxu0
        %v1106 = vadd.f32 %v961, %v1105
        %v1107 = vpop.f32.mrb[0].mxu0
        %1108 = vmatprep.mubr.bf16.mxu0 0
        %1109 = vmatmul.mubr.bf16.gmra.mrb[0].mxu0 %v659
        %v1110 = vpop.f32.mrb[0].mxu0
        %v1111 = vadd.f32 %v966, %v1110
        %v1112 = vpop.f32.mrb[0].mxu0
        %v1113 = vpop.f32.mrb[0].mxu0
        %v1114 = vadd.f32 %v969, %v1113
        %v1115 = vpop.f32.mrb[0].mxu0
        %1116 = vmatprep.mubr.bf16.mxu0 0
        %1117 = vmatmul.mubr.bf16.gmra.mrb[0].mxu0 %v660
        %v1118 = vpop.f32.mrb[0].mxu0
        %v1119 = vadd.f32 %v974, %v1118
        %v1120 = vpop.f32.mrb[0].mxu0
        %v1121 = vpop.f32.mrb[0].mxu0
        %v1122 = vadd.f32 %v977, %v1121
        %v1123 = vpop.f32.mrb[0].mxu0
        %1124 = vmatprep.mubr.bf16.mxu0 0
        %1125 = vmatmul.mubr.bf16.gmra.mrb[0].mxu0 %v661
        %v1126 = vpop.f32.mrb[0].mxu0
        %v1127 = vadd.f32 %v982, %v1126
        %v1128 = vpop.f32.mrb[0].mxu0
        %v1129 = vpop.f32.mrb[0].mxu0
        %v1130 = vadd.f32 %v985, %v1129
        %v1131 = vpop.f32.mrb[0].mxu0
        %1132 = vmatprep.mubr.bf16.mxu0 0
        %1133 = vmatmul.mubr.bf16.gmra.mrb[0].mxu0 %v662
        %v1134 = vpop.f32.mrb[0].mxu0
        %v1135 = vadd.f32 %v990, %v1134
        %v1136 = vpop.f32.mrb[0].mxu0
        %v1137 = vpop.f32.mrb[0].mxu0
        %v1138 = vadd.f32 %v993, %v1137
        %v1139 = vpop.f32.mrb[0].mxu0
        %1140 = vmatprep.mubr.bf16.mxu0 0
        %1141 = vmatmul.mubr.bf16.gmra.mrb[0].mxu0 %v663
        %v1142 = vpop.f32.mrb[0].mxu0
        %v1143 = vadd.f32 %v998, %v1142
        %v1144 = vpop.f32.mrb[0].mxu0
        %v1145 = vpop.f32.mrb[0].mxu0
        %v1146 = vadd.f32 %v1001, %v1145
        %v1147 = vpop.f32.mrb[0].mxu0
        %1148 = vmatprep.mubr.bf16.mxu0 0
        %1149 = vmatmul.mubr.bf16.gmra.mrb[0].mxu0 %v664
        %v1150 = vpop.f32.mrb[0].mxu0
        %v1151 = vadd.f32 %v1006, %v1150
        %v1152 = vpop.f32.mrb[0].mxu0
        %v1153 = vpop.f32.mrb[0].mxu0
        %v1154 = vadd.f32 %v1009, %v1153
        %v1155 = vpop.f32.mrb[0].mxu0
        %1156 = vmatprep.mubr.bf16.mxu0 0
        %1157 = vmatmul.mubr.bf16.gmra.mrb[0].mxu0 %v665
        %v1158 = vpop.f32.mrb[0].mxu0
        %v1159 = vadd.f32 %v1014, %v1158
        %v1160 = vpop.f32.mrb[0].mxu0
        %v1161 = vpop.f32.mrb[0].mxu0
        %v1162 = vadd.f32 %v1017, %v1161
        %v1163 = vpop.f32.mrb[0].mxu0
        %1164 = vdwg.mxu0
        %v1165 = vtanh.pop %v1103
        %v1166 = vtanh.pop %v1106
        %v1167 = vtanh.pop %v1111
        %v1168 = vtanh.pop %v1114
        %v1169 = vtanh.pop %v1119
        %v1170 = vtanh.pop %v1122
        %v1171 = vtanh.pop %v1127
        %v1172 = vtanh.pop %v1130
        %v1173 = vtanh.pop %v1135
        %v1174 = vtanh.pop %v1138
        %v1175 = vtanh.pop %v1143
        %v1176 = vtanh.pop %v1146
        %v1177 = vtanh.pop %v1151
        %v1178 = vtanh.pop %v1154
        %v1179 = vtanh.pop %v1159
        %v1180 = vtanh.pop %v1162
        %v1181 = vpack.c.bf16 %v1166, %v1165
        %v1182 = vpack.c.bf16 %v1168, %v1167
        %v1183 = vpack.c.bf16 %v1170, %v1169
        %v1184 = vpack.c.bf16 %v1172, %v1171
        %v1185 = vpack.c.bf16 %v1174, %v1173
        %v1186 = vpack.c.bf16 %v1176, %v1175
        %v1187 = vpack.c.bf16 %v1178, %v1177
        %v1188 = vpack.c.bf16 %v1180, %v1179
        %v1189 = vld [vmem:[#allocation10] sm:$0xf]
        %v1190 = vld [vmem:[#allocation10 + $0x4] sm:$0xf]
        %v1191 = vld [vmem:[#allocation10 + $0x8] sm:$0xf]
        %v1192 = vld [vmem:[#allocation10 + $0xc] sm:$0xf]
        %v1193 = vld [vmem:[#allocation10 + $0x10] sm:$0xf]
        %v1194 = vld [vmem:[#allocation10 + $0x14] sm:$0xf]
        %v1195 = vld [vmem:[#allocation10 + $0x18] sm:$0xf]
        %v1196 = vld [vmem:[#allocation10 + $0x1c] sm:$0xf]
        %v1197 = vld [vmem:[#allocation10 + $0x20] sm:$0xf]
        %v1198 = vld [vmem:[#allocation10 + $0x24] sm:$0xf]
        %v1199 = vld [vmem:[#allocation10 + $0x28] sm:$0xf]
        %v1200 = vld [vmem:[#allocation10 + $0x2c] sm:$0xf]
        %v1201 = vld [vmem:[#allocation10 + $0x30] sm:$0xf]
        %v1202 = vld [vmem:[#allocation10 + $0x34] sm:$0xf]
        %v1203 = vld [vmem:[#allocation10 + $0x38] sm:$0xf]
        %v1204 = vld [vmem:[#allocation10 + $0x3c] sm:$0xf]
        %v1205 = vld [vmem:[#allocation10 + $0x40] sm:$0xf]
        %v1206 = vld [vmem:[#allocation10 + $0x44] sm:$0xf]
        %v1207 = vld [vmem:[#allocation10 + $0x48] sm:$0xf]
        %v1208 = vld [vmem:[#allocation10 + $0x4c] sm:$0xf]
        %v1209 = vld [vmem:[#allocation10 + $0x50] sm:$0xf]
        %v1210 = vld [vmem:[#allocation10 + $0x54] sm:$0xf]
        %v1211 = vld [vmem:[#allocation10 + $0x58] sm:$0xf]
        %v1212 = vld [vmem:[#allocation10 + $0x5c] sm:$0xf]
        %v1213 = vld [vmem:[#allocation10 + $0x60] sm:$0xf]
        %v1214 = vld [vmem:[#allocation10 + $0x64] sm:$0xf]
        %v1215 = vld [vmem:[#allocation10 + $0x68] sm:$0xf]
        %v1216 = vld [vmem:[#allocation10 + $0x6c] sm:$0xf]
        %v1217 = vld [vmem:[#allocation10 + $0x70] sm:$0xf]
        %v1218 = vld [vmem:[#allocation10 + $0x74] sm:$0xf]
        %v1219 = vld [vmem:[#allocation10 + $0x78] sm:$0xf]
        %v1220 = vld [vmem:[#allocation10 + $0x7c] sm:$0xf]
        %v1237 = vunpack.c.l.b16 %v1205
        %v1238 = vunpack.c.l.b16 %v1206
        %v1239 = vunpack.c.l.b16 %v1207
        %v1240 = vunpack.c.l.b16 %v1208
        %v1241 = vunpack.c.l.b16 %v1209
        %v1242 = vunpack.c.l.b16 %v1210
        %v1243 = vunpack.c.l.b16 %v1211
        %v1244 = vunpack.c.l.b16 %v1212
        %v1245 = vunpack.c.l.b16 %v1213
        %v1246 = vunpack.c.l.b16 %v1214
        %v1247 = vunpack.c.l.b16 %v1215
        %v1248 = vunpack.c.l.b16 %v1216
        %v1249 = vunpack.c.l.b16 %v1217
        %v1250 = vunpack.c.l.b16 %v1218
        %v1251 = vunpack.c.l.b16 %v1219
        %v1252 = vunpack.c.l.b16 %v1220
        %v1253 = vpack.c.b16 %v1238, %v1237
        %v1254 = vpack.c.b16 %v1240, %v1239
        %v1255 = vpack.c.b16 %v1242, %v1241
        %v1256 = vpack.c.b16 %v1244, %v1243
        %v1257 = vpack.c.b16 %v1246, %v1245
        %v1258 = vpack.c.b16 %v1248, %v1247
        %v1259 = vpack.c.b16 %v1250, %v1249
        %v1260 = vpack.c.b16 %v1252, %v1251
        %1269 = vmatprep.subr.bf16.mxu0 0
        %1270 = vmatpush1.bf16.msra.mxu0 %v1253
        %1271 = vmatprep.subr.bf16.mxu0 0
        %1272 = vmatpush1.bf16.msra.mxu0 %v1254
        %1273 = vmatprep.subr.bf16.mxu0 0
        %1274 = vmatpush1.bf16.msra.mxu0 %v1255
        %1275 = vmatprep.subr.bf16.mxu0 0
        %1276 = vmatpush1.bf16.msra.mxu0 %v1256
        %1277 = vmatprep.subr.bf16.mxu0 0
        %1278 = vmatpush1.bf16.msra.mxu0 %v1257
        %1279 = vmatprep.subr.bf16.mxu0 0
        %1280 = vmatpush1.bf16.msra.mxu0 %v1258
        %1281 = vmatprep.subr.bf16.mxu0 0
        %1282 = vmatpush1.bf16.msra.mxu0 %v1259
        %1283 = vmatprep.subr.bf16.mxu0 0
        %1284 = vmatpush1.bf16.msra.mxu0 %v1260
        %1285 = vmatprep.subr.bf16.mxu0 0
        %1286 = vmatpush1.bf16.msra.mxu0 0
        %1287 = vmatprep.subr.bf16.mxu0 0
        %1288 = vmatpush1.bf16.msra.mxu0 0
        %1289 = vmatprep.subr.bf16.mxu0 0
        %1290 = vmatpush1.bf16.msra.mxu0 0
        %1291 = vmatprep.subr.bf16.mxu0 0
        %1292 = vmatpush1.bf16.msra.mxu0 0
        %1293 = vmatprep.subr.bf16.mxu0 0
        %1294 = vmatpush1.bf16.msra.mxu0 0
        %1295 = vmatprep.subr.bf16.mxu0 0
        %1296 = vmatpush1.bf16.msra.mxu0 0
        %1297 = vmatprep.subr.bf16.mxu0 0
        %1298 = vmatpush1.bf16.msra.mxu0 0
        %1299 = vmatprep.subr.bf16.mxu0 0
        %1300 = vmatpush1.bf16.msra.mxu0 0
        %1301 = vmatprep.mubr.bf16.mxu0 0
        %1302 = vmatmul.mubr.bf16.gmra.mrb[0].mxu0 %v835
        %v1303 = vpop.f32.mrb[0].mxu0
        %v1304 = vadd.f32 0.0, %v1303
        %v1305 = vpop.f32.mrb[0].mxu0
        %v1306 = vpop.f32.mrb[0].mxu0
        %v1307 = vadd.f32 0.0, %v1306
        %v1308 = vpop.f32.mrb[0].mxu0
        %1309 = vmatprep.mubr.bf16.mxu0 0
        %1310 = vmatmul.mubr.bf16.gmra.mrb[0].mxu0 %v836
        %v1311 = vpop.f32.mrb[0].mxu0
        %v1312 = vadd.f32 0.0, %v1311
        %v1313 = vpop.f32.mrb[0].mxu0
        %v1314 = vpop.f32.mrb[0].mxu0
        %v1315 = vadd.f32 0.0, %v1314
        %v1316 = vpop.f32.mrb[0].mxu0
        %1317 = vmatprep.mubr.bf16.mxu0 0
        %1318 = vmatmul.mubr.bf16.gmra.mrb[0].mxu0 %v837
        %v1319 = vpop.f32.mrb[0].mxu0
        %v1320 = vadd.f32 0.0, %v1319
        %v1321 = vpop.f32.mrb[0].mxu0
        %v1322 = vpop.f32.mrb[0].mxu0
        %v1323 = vadd.f32 0.0, %v1322
        %v1324 = vpop.f32.mrb[0].mxu0
        %1325 = vmatprep.mubr.bf16.mxu0 0
        %1326 = vmatmul.mubr.bf16.gmra.mrb[0].mxu0 %v838
        %v1327 = vpop.f32.mrb[0].mxu0
        %v1328 = vadd.f32 0.0, %v1327
        %v1329 = vpop.f32.mrb[0].mxu0
        %v1330 = vpop.f32.mrb[0].mxu0
        %v1331 = vadd.f32 0.0, %v1330
        %v1332 = vpop.f32.mrb[0].mxu0
        %1333 = vmatprep.mubr.bf16.mxu0 0
        %1334 = vmatmul.mubr.bf16.gmra.mrb[0].mxu0 %v839
        %v1335 = vpop.f32.mrb[0].mxu0
        %v1336 = vadd.f32 0.0, %v1335
        %v1337 = vpop.f32.mrb[0].mxu0
        %v1338 = vpop.f32.mrb[0].mxu0
        %v1339 = vadd.f32 0.0, %v1338
        %v1340 = vpop.f32.mrb[0].mxu0
        %1341 = vmatprep.mubr.bf16.mxu0 0
        %1342 = vmatmul.mubr.bf16.gmra.mrb[0].mxu0 %v840
        %v1343 = vpop.f32.mrb[0].mxu0
        %v1344 = vadd.f32 0.0, %v1343
        %v1345 = vpop.f32.mrb[0].mxu0
        %v1346 = vpop.f32.mrb[0].mxu0
        %v1347 = vadd.f32 0.0, %v1346
        %v1348 = vpop.f32.mrb[0].mxu0
        %1349 = vmatprep.mubr.bf16.mxu0 0
        %1350 = vmatmul.mubr.bf16.gmra.mrb[0].mxu0 %v841
        %v1351 = vpop.f32.mrb[0].mxu0
        %v1352 = vadd.f32 0.0, %v1351
        %v1353 = vpop.f32.mrb[0].mxu0
        %v1354 = vpop.f32.mrb[0].mxu0
        %v1355 = vadd.f32 0.0, %v1354
        %v1356 = vpop.f32.mrb[0].mxu0
        %1357 = vmatprep.mubr.bf16.mxu0 0
        %1358 = vmatmul.mubr.bf16.gmra.mrb[0].mxu0 %v842
        %v1359 = vpop.f32.mrb[0].mxu0
        %v1360 = vadd.f32 0.0, %v1359
        %v1361 = vpop.f32.mrb[0].mxu0
        %v1362 = vpop.f32.mrb[0].mxu0
        %v1363 = vadd.f32 0.0, %v1362
        %v1364 = vpop.f32.mrb[0].mxu0
        %1365 = vdwg.mxu0
        %v1382 = vunpack.c.l.b16 %v1189
        %v1383 = vunpack.c.l.b16 %v1190
        %v1384 = vunpack.c.l.b16 %v1191
        %v1385 = vunpack.c.l.b16 %v1192
        %v1386 = vunpack.c.l.b16 %v1193
        %v1387 = vunpack.c.l.b16 %v1194
        %v1388 = vunpack.c.l.b16 %v1195
        %v1389 = vunpack.c.l.b16 %v1196
        %v1390 = vunpack.c.l.b16 %v1197
        %v1391 = vunpack.c.l.b16 %v1198
        %v1392 = vunpack.c.l.b16 %v1199
        %v1393 = vunpack.c.l.b16 %v1200
        %v1394 = vunpack.c.l.b16 %v1201
        %v1395 = vunpack.c.l.b16 %v1202
        %v1396 = vunpack.c.l.b16 %v1203
        %v1397 = vunpack.c.l.b16 %v1204
        %v1398 = vpack.c.b16 %v1383, %v1382
        %v1399 = vpack.c.b16 %v1385, %v1384
        %v1400 = vpack.c.b16 %v1387, %v1386
        %v1401 = vpack.c.b16 %v1389, %v1388
        %v1402 = vpack.c.b16 %v1391, %v1390
        %v1403 = vpack.c.b16 %v1393, %v1392
        %v1404 = vpack.c.b16 %v1395, %v1394
        %v1405 = vpack.c.b16 %v1397, %v1396
        %1414 = vmatprep.subr.bf16.mxu0 0
        %1415 = vmatpush1.bf16.msra.mxu0 %v1398
        %1416 = vmatprep.subr.bf16.mxu0 0
        %1417 = vmatpush1.bf16.msra.mxu0 %v1399
        %1418 = vmatprep.subr.bf16.mxu0 0
        %1419 = vmatpush1.bf16.msra.mxu0 %v1400
        %1420 = vmatprep.subr.bf16.mxu0 0
        %1421 = vmatpush1.bf16.msra.mxu0 %v1401
        %1422 = vmatprep.subr.bf16.mxu0 0
        %1423 = vmatpush1.bf16.msra.mxu0 %v1402
        %1424 = vmatprep.subr.bf16.mxu0 0
        %1425 = vmatpush1.bf16.msra.mxu0 %v1403
        %1426 = vmatprep.subr.bf16.mxu0 0
        %1427 = vmatpush1.bf16.msra.mxu0 %v1404
        %1428 = vmatprep.subr.bf16.mxu0 0
        %1429 = vmatpush1.bf16.msra.mxu0 %v1405
        %1430 = vmatprep.subr.bf16.mxu0 0
        %1431 = vmatpush1.bf16.msra.mxu0 0
        %1432 = vmatprep.subr.bf16.mxu0 0
        %1433 = vmatpush1.bf16.msra.mxu0 0
        %1434 = vmatprep.subr.bf16.mxu0 0
        %1435 = vmatpush1.bf16.msra.mxu0 0
        %1436 = vmatprep.subr.bf16.mxu0 0
        %1437 = vmatpush1.bf16.msra.mxu0 0
        %1438 = vmatprep.subr.bf16.mxu0 0
        %1439 = vmatpush1.bf16.msra.mxu0 0
        %1440 = vmatprep.subr.bf16.mxu0 0
        %1441 = vmatpush1.bf16.msra.mxu0 0
        %1442 = vmatprep.subr.bf16.mxu0 0
        %1443 = vmatpush1.bf16.msra.mxu0 0
        %1444 = vmatprep.subr.bf16.mxu0 0
        %1445 = vmatpush1.bf16.msra.mxu0 0
        %1446 = vmatprep.mubr.bf16.mxu0 0
        %1447 = vmatmul.mubr.bf16.gmra.mrb[0].mxu0 %v658
        %v1448 = vpop.f32.mrb[0].mxu0
        %v1449 = vadd.f32 %v1304, %v1448
        %v1450 = vpop.f32.mrb[0].mxu0
        %v1451 = vpop.f32.mrb[0].mxu0
        %v1452 = vadd.f32 %v1307, %v1451
        %v1453 = vpop.f32.mrb[0].mxu0
        %1454 = vmatprep.mubr.bf16.mxu0 0
        %1455 = vmatmul.mubr.bf16.gmra.mrb[0].mxu0 %v659
        %v1456 = vpop.f32.mrb[0].mxu0
        %v1457 = vadd.f32 %v1312, %v1456
        %v1458 = vpop.f32.mrb[0].mxu0
        %v1459 = vpop.f32.mrb[0].mxu0
        %v1460 = vadd.f32 %v1315, %v1459
        %v1461 = vpop.f32.mrb[0].mxu0
        %1462 = vmatprep.mubr.bf16.mxu0 0
        %1463 = vmatmul.mubr.bf16.gmra.mrb[0].mxu0 %v660
        %v1464 = vpop.f32.mrb[0].mxu0
        %v1465 = vadd.f32 %v1320, %v1464
        %v1466 = vpop.f32.mrb[0].mxu0
        %v1467 = vpop.f32.mrb[0].mxu0
        %v1468 = vadd.f32 %v1323, %v1467
        %v1469 = vpop.f32.mrb[0].mxu0
        %1470 = vmatprep.mubr.bf16.mxu0 0
        %1471 = vmatmul.mubr.bf16.gmra.mrb[0].mxu0 %v661
        %v1472 = vpop.f32.mrb[0].mxu0
        %v1473 = vadd.f32 %v1328, %v1472
        %v1474 = vpop.f32.mrb[0].mxu0
        %v1475 = vpop.f32.mrb[0].mxu0
        %v1476 = vadd.f32 %v1331, %v1475
        %v1477 = vpop.f32.mrb[0].mxu0
        %1478 = vmatprep.mubr.bf16.mxu0 0
        %1479 = vmatmul.mubr.bf16.gmra.mrb[0].mxu0 %v662
        %v1480 = vpop.f32.mrb[0].mxu0
        %v1481 = vadd.f32 %v1336, %v1480
        %v1482 = vpop.f32.mrb[0].mxu0
        %v1483 = vpop.f32.mrb[0].mxu0
        %v1484 = vadd.f32 %v1339, %v1483
        %v1485 = vpop.f32.mrb[0].mxu0
        %1486 = vmatprep.mubr.bf16.mxu0 0
        %1487 = vmatmul.mubr.bf16.gmra.mrb[0].mxu0 %v663
        %v1488 = vpop.f32.mrb[0].mxu0
        %v1489 = vadd.f32 %v1344, %v1488
        %v1490 = vpop.f32.mrb[0].mxu0
        %v1491 = vpop.f32.mrb[0].mxu0
        %v1492 = vadd.f32 %v1347, %v1491
        %v1493 = vpop.f32.mrb[0].mxu0
        %1494 = vmatprep.mubr.bf16.mxu0 0
        %1495 = vmatmul.mubr.bf16.gmra.mrb[0].mxu0 %v664
        %v1496 = vpop.f32.mrb[0].mxu0
        %v1497 = vadd.f32 %v1352, %v1496
        %v1498 = vpop.f32.mrb[0].mxu0
        %v1499 = vpop.f32.mrb[0].mxu0
        %v1500 = vadd.f32 %v1355, %v1499
        %v1501 = vpop.f32.mrb[0].mxu0
        %1502 = vmatprep.mubr.bf16.mxu0 0
        %1503 = vmatmul.mubr.bf16.gmra.mrb[0].mxu0 %v665
        %v1504 = vpop.f32.mrb[0].mxu0
        %v1505 = vadd.f32 %v1360, %v1504
        %v1506 = vpop.f32.mrb[0].mxu0
        %v1507 = vpop.f32.mrb[0].mxu0
        %v1508 = vadd.f32 %v1363, %v1507
        %v1509 = vpop.f32.mrb[0].mxu0
        %1510 = vdwg.mxu0
        %v1511 = vld [vmem:[#allocation10 + $0x80] sm:$0xf]
        %v1512 = vld [vmem:[#allocation10 + $0x84] sm:$0xf]
        %v1513 = vld [vmem:[#allocation10 + $0x88] sm:$0xf]
        %v1514 = vld [vmem:[#allocation10 + $0x8c] sm:$0xf]
        %v1515 = vld [vmem:[#allocation10 + $0x90] sm:$0xf]
        %v1516 = vld [vmem:[#allocation10 + $0x94] sm:$0xf]
        %v1517 = vld [vmem:[#allocation10 + $0x98] sm:$0xf]
        %v1518 = vld [vmem:[#allocation10 + $0x9c] sm:$0xf]
        %v1519 = vld [vmem:[#allocation10 + $0xa0] sm:$0xf]
        %v1520 = vld [vmem:[#allocation10 + $0xa4] sm:$0xf]
        %v1521 = vld [vmem:[#allocation10 + $0xa8] sm:$0xf]
        %v1522 = vld [vmem:[#allocation10 + $0xac] sm:$0xf]
        %v1523 = vld [vmem:[#allocation10 + $0xb0] sm:$0xf]
        %v1524 = vld [vmem:[#allocation10 + $0xb4] sm:$0xf]
        %v1525 = vld [vmem:[#allocation10 + $0xb8] sm:$0xf]
        %v1526 = vld [vmem:[#allocation10 + $0xbc] sm:$0xf]
        %v1543 = vunpack.c.l.b16 %v1511
        %v1544 = vunpack.c.l.b16 %v1512
        %v1545 = vunpack.c.l.b16 %v1513
        %v1546 = vunpack.c.l.b16 %v1514
        %v1547 = vunpack.c.l.b16 %v1515
        %v1548 = vunpack.c.l.b16 %v1516
        %v1549 = vunpack.c.l.b16 %v1517
        %v1550 = vunpack.c.l.b16 %v1518
        %v1551 = vunpack.c.l.b16 %v1519
        %v1552 = vunpack.c.l.b16 %v1520
        %v1553 = vunpack.c.l.b16 %v1521
        %v1554 = vunpack.c.l.b16 %v1522
        %v1555 = vunpack.c.l.b16 %v1523
        %v1556 = vunpack.c.l.b16 %v1524
        %v1557 = vunpack.c.l.b16 %v1525
        %v1558 = vunpack.c.l.b16 %v1526
        %v1559 = vpack.c.b16 %v1544, %v1543
        %v1560 = vpack.c.b16 %v1546, %v1545
        %v1561 = vpack.c.b16 %v1548, %v1547
        %v1562 = vpack.c.b16 %v1550, %v1549
        %v1563 = vpack.c.b16 %v1552, %v1551
        %v1564 = vpack.c.b16 %v1554, %v1553
        %v1565 = vpack.c.b16 %v1556, %v1555
        %v1566 = vpack.c.b16 %v1558, %v1557
        %1575 = vmatprep.subr.bf16.mxu0 0
        %1576 = vmatpush1.bf16.msra.mxu0 %v1559
        %1577 = vmatprep.subr.bf16.mxu0 0
        %1578 = vmatpush1.bf16.msra.mxu0 %v1560
        %1579 = vmatprep.subr.bf16.mxu0 0
        %1580 = vmatpush1.bf16.msra.mxu0 %v1561
        %1581 = vmatprep.subr.bf16.mxu0 0
        %1582 = vmatpush1.bf16.msra.mxu0 %v1562
        %1583 = vmatprep.subr.bf16.mxu0 0
        %1584 = vmatpush1.bf16.msra.mxu0 %v1563
        %1585 = vmatprep.subr.bf16.mxu0 0
        %1586 = vmatpush1.bf16.msra.mxu0 %v1564
        %1587 = vmatprep.subr.bf16.mxu0 0
        %1588 = vmatpush1.bf16.msra.mxu0 %v1565
        %1589 = vmatprep.subr.bf16.mxu0 0
        %1590 = vmatpush1.bf16.msra.mxu0 %v1566
        %1591 = vmatprep.subr.bf16.mxu0 0
        %1592 = vmatpush1.bf16.msra.mxu0 0
        %1593 = vmatprep.subr.bf16.mxu0 0
        %1594 = vmatpush1.bf16.msra.mxu0 0
        %1595 = vmatprep.subr.bf16.mxu0 0
        %1596 = vmatpush1.bf16.msra.mxu0 0
        %1597 = vmatprep.subr.bf16.mxu0 0
        %1598 = vmatpush1.bf16.msra.mxu0 0
        %1599 = vmatprep.subr.bf16.mxu0 0
        %1600 = vmatpush1.bf16.msra.mxu0 0
        %1601 = vmatprep.subr.bf16.mxu0 0
        %1602 = vmatpush1.bf16.msra.mxu0 0
        %1603 = vmatprep.subr.bf16.mxu0 0
        %1604 = vmatpush1.bf16.msra.mxu0 0
        %1605 = vmatprep.subr.bf16.mxu0 0
        %1606 = vmatpush1.bf16.msra.mxu0 0
        %1607 = vmatprep.mubr.bf16.mxu0 0
        %1608 = vmatmul.mubr.bf16.gmra.mrb[0].mxu0 %v1181
        %v1609 = vpop.f32.mrb[0].mxu0
        %v1610 = vadd.f32 0.0, %v1609
        %v1611 = vpop.f32.mrb[0].mxu0
        %v1612 = vpop.f32.mrb[0].mxu0
        %v1613 = vadd.f32 0.0, %v1612
        %v1614 = vpop.f32.mrb[0].mxu0
        %1615 = vmatprep.mubr.bf16.mxu0 0
        %1616 = vmatmul.mubr.bf16.gmra.mrb[0].mxu0 %v1182
        %v1617 = vpop.f32.mrb[0].mxu0
        %v1618 = vadd.f32 0.0, %v1617
        %v1619 = vpop.f32.mrb[0].mxu0
        %v1620 = vpop.f32.mrb[0].mxu0
        %v1621 = vadd.f32 0.0, %v1620
        %v1622 = vpop.f32.mrb[0].mxu0
        %1623 = vmatprep.mubr.bf16.mxu0 0
        %1624 = vmatmul.mubr.bf16.gmra.mrb[0].mxu0 %v1183
        %v1625 = vpop.f32.mrb[0].mxu0
        %v1626 = vadd.f32 0.0, %v1625
        %v1627 = vpop.f32.mrb[0].mxu0
        %v1628 = vpop.f32.mrb[0].mxu0
        %v1629 = vadd.f32 0.0, %v1628
        %v1630 = vpop.f32.mrb[0].mxu0
        %1631 = vmatprep.mubr.bf16.mxu0 0
        %1632 = vmatmul.mubr.bf16.gmra.mrb[0].mxu0 %v1184
        %v1633 = vpop.f32.mrb[0].mxu0
        %v1634 = vadd.f32 0.0, %v1633
        %v1635 = vpop.f32.mrb[0].mxu0
        %v1636 = vpop.f32.mrb[0].mxu0
        %v1637 = vadd.f32 0.0, %v1636
        %v1638 = vpop.f32.mrb[0].mxu0
        %1639 = vmatprep.mubr.bf16.mxu0 0
        %1640 = vmatmul.mubr.bf16.gmra.mrb[0].mxu0 %v1185
        %v1641 = vpop.f32.mrb[0].mxu0
        %v1642 = vadd.f32 0.0, %v1641
        %v1643 = vpop.f32.mrb[0].mxu0
        %v1644 = vpop.f32.mrb[0].mxu0
        %v1645 = vadd.f32 0.0, %v1644
        %v1646 = vpop.f32.mrb[0].mxu0
        %1647 = vmatprep.mubr.bf16.mxu0 0
        %1648 = vmatmul.mubr.bf16.gmra.mrb[0].mxu0 %v1186
        %v1649 = vpop.f32.mrb[0].mxu0
        %v1650 = vadd.f32 0.0, %v1649
        %v1651 = vpop.f32.mrb[0].mxu0
        %v1652 = vpop.f32.mrb[0].mxu0
        %v1653 = vadd.f32 0.0, %v1652
        %v1654 = vpop.f32.mrb[0].mxu0
        %1655 = vmatprep.mubr.bf16.mxu0 0
        %1656 = vmatmul.mubr.bf16.gmra.mrb[0].mxu0 %v1187
        %v1657 = vpop.f32.mrb[0].mxu0
        %v1658 = vadd.f32 0.0, %v1657
        %v1659 = vpop.f32.mrb[0].mxu0
        %v1660 = vpop.f32.mrb[0].mxu0
        %v1661 = vadd.f32 0.0, %v1660
        %v1662 = vpop.f32.mrb[0].mxu0
        %1663 = vmatprep.mubr.bf16.mxu0 0
        %1664 = vmatmul.mubr.bf16.gmra.mrb[0].mxu0 %v1188
        %v1665 = vpop.f32.mrb[0].mxu0
        %v1666 = vadd.f32 0.0, %v1665
        %v1667 = vpop.f32.mrb[0].mxu0
        %v1668 = vpop.f32.mrb[0].mxu0
        %v1669 = vadd.f32 0.0, %v1668
        %v1670 = vpop.f32.mrb[0].mxu0
        %1671 = vdwg.mxu0
        %v1672 = vadd.f32 %v1449, %v1610
        %v1673 = vadd.f32 %v1452, %v1613
        %v1674 = vadd.f32 %v1457, %v1618
        %v1675 = vadd.f32 %v1460, %v1621
        %v1676 = vadd.f32 %v1465, %v1626
        %v1677 = vadd.f32 %v1468, %v1629
        %v1678 = vadd.f32 %v1473, %v1634
        %v1679 = vadd.f32 %v1476, %v1637
        %v1680 = vadd.f32 %v1481, %v1642
        %v1681 = vadd.f32 %v1484, %v1645
        %v1682 = vadd.f32 %v1489, %v1650
        %v1683 = vadd.f32 %v1492, %v1653
        %v1684 = vadd.f32 %v1497, %v1658
        %v1685 = vadd.f32 %v1500, %v1661
        %v1686 = vadd.f32 %v1505, %v1666
        %v1687 = vadd.f32 %v1508, %v1669
        %v1688 = vmul.bf16 %v369, %v369
        %v1689 = vmul.bf16 %v370, %v370
        %v1690 = vmul.bf16 %v371, %v371
        %v1691 = vmul.bf16 %v372, %v372
        %v1692 = vmul.bf16 %v373, %v373
        %v1693 = vmul.bf16 %v374, %v374
        %v1694 = vmul.bf16 %v375, %v375
        %v1695 = vmul.bf16 %v376, %v376
        %v1696 = vmul.bf16 %v377, %v377
        %v1697 = vmul.bf16 %v378, %v378
        %v1698 = vmul.bf16 %v379, %v379
        %v1699 = vmul.bf16 %v380, %v380
        %v1700 = vmul.bf16 %v381, %v381
        %v1701 = vmul.bf16 %v382, %v382
        %v1702 = vmul.bf16 %v383, %v383
        %v1703 = vmul.bf16 %v384, %v384
        %v1704 = vld [vmem:[#allocation10 + $0xc0] sm:$0xf]
        %v1705 = vld [vmem:[#allocation10 + $0xc4] sm:$0xf]
        %v1706 = vld [vmem:[#allocation10 + $0xc8] sm:$0xf]
        %v1707 = vld [vmem:[#allocation10 + $0xcc] sm:$0xf]
        %v1708 = vld [vmem:[#allocation10 + $0xd0] sm:$0xf]
        %v1709 = vld [vmem:[#allocation10 + $0xd4] sm:$0xf]
        %v1710 = vld [vmem:[#allocation10 + $0xd8] sm:$0xf]
        %v1711 = vld [vmem:[#allocation10 + $0xdc] sm:$0xf]
        %v1712 = vld [vmem:[#allocation10 + $0xe0] sm:$0xf]
        %v1713 = vld [vmem:[#allocation10 + $0xe4] sm:$0xf]
        %v1714 = vld [vmem:[#allocation10 + $0xe8] sm:$0xf]
        %v1715 = vld [vmem:[#allocation10 + $0xec] sm:$0xf]
        %v1716 = vld [vmem:[#allocation10 + $0xf0] sm:$0xf]
        %v1717 = vld [vmem:[#allocation10 + $0xf4] sm:$0xf]
        %v1718 = vld [vmem:[#allocation10 + $0xf8] sm:$0xf]
        %v1719 = vld [vmem:[#allocation10 + $0xfc] sm:$0xf]
        %v1736 = vunpack.c.l.b16 %v1688
        %v1737 = vunpack.c.l.b16 %v1689
        %v1738 = vunpack.c.l.b16 %v1690
        %v1739 = vunpack.c.l.b16 %v1691
        %v1740 = vunpack.c.l.b16 %v1692
        %v1741 = vunpack.c.l.b16 %v1693
        %v1742 = vunpack.c.l.b16 %v1694
        %v1743 = vunpack.c.l.b16 %v1695
        %v1744 = vunpack.c.l.b16 %v1696
        %v1745 = vunpack.c.l.b16 %v1697
        %v1746 = vunpack.c.l.b16 %v1698
        %v1747 = vunpack.c.l.b16 %v1699
        %v1748 = vunpack.c.l.b16 %v1700
        %v1749 = vunpack.c.l.b16 %v1701
        %v1750 = vunpack.c.l.b16 %v1702
        %v1751 = vunpack.c.l.b16 %v1703
        %v1752 = vpack.c.b16 %v1737, %v1736
        %v1753 = vpack.c.b16 %v1739, %v1738
        %v1754 = vpack.c.b16 %v1741, %v1740
        %v1755 = vpack.c.b16 %v1743, %v1742
        %v1756 = vpack.c.b16 %v1745, %v1744
        %v1757 = vpack.c.b16 %v1747, %v1746
        %v1758 = vpack.c.b16 %v1749, %v1748
        %v1759 = vpack.c.b16 %v1751, %v1750
        %v1784 = vunpack.c.l.b16 %v1704
        %v1785 = vunpack.c.l.b16 %v1705
        %v1786 = vunpack.c.l.b16 %v1706
        %v1787 = vunpack.c.l.b16 %v1707
        %v1788 = vunpack.c.l.b16 %v1708
        %v1789 = vunpack.c.l.b16 %v1709
        %v1790 = vunpack.c.l.b16 %v1710
        %v1791 = vunpack.c.l.b16 %v1711
        %v1792 = vunpack.c.l.b16 %v1712
        %v1793 = vunpack.c.l.b16 %v1713
        %v1794 = vunpack.c.l.b16 %v1714
        %v1795 = vunpack.c.l.b16 %v1715
        %v1796 = vunpack.c.l.b16 %v1716
        %v1797 = vunpack.c.l.b16 %v1717
        %v1798 = vunpack.c.l.b16 %v1718
        %v1799 = vunpack.c.l.b16 %v1719
        %v1800 = vpack.c.b16 %v1785, %v1784
        %v1801 = vpack.c.b16 %v1787, %v1786
        %v1802 = vpack.c.b16 %v1789, %v1788
        %v1803 = vpack.c.b16 %v1791, %v1790
        %v1804 = vpack.c.b16 %v1793, %v1792
        %v1805 = vpack.c.b16 %v1795, %v1794
        %v1806 = vpack.c.b16 %v1797, %v1796
        %v1807 = vpack.c.b16 %v1799, %v1798
        %1816 = vmatprep.subr.bf16.mxu0 0
        %1817 = vmatpush1.bf16.msra.mxu0 %v1800
        %1818 = vmatprep.subr.bf16.mxu0 0
        %1819 = vmatpush1.bf16.msra.mxu0 %v1801
        %1820 = vmatprep.subr.bf16.mxu0 0
        %1821 = vmatpush1.bf16.msra.mxu0 %v1802
        %1822 = vmatprep.subr.bf16.mxu0 0
        %1823 = vmatpush1.bf16.msra.mxu0 %v1803
        %1824 = vmatprep.subr.bf16.mxu0 0
        %1825 = vmatpush1.bf16.msra.mxu0 %v1804
        %1826 = vmatprep.subr.bf16.mxu0 0
        %1827 = vmatpush1.bf16.msra.mxu0 %v1805
        %1828 = vmatprep.subr.bf16.mxu0 0
        %1829 = vmatpush1.bf16.msra.mxu0 %v1806
        %1830 = vmatprep.subr.bf16.mxu0 0
        %1831 = vmatpush1.bf16.msra.mxu0 %v1807
        %1832 = vmatprep.subr.bf16.mxu0 0
        %1833 = vmatpush1.bf16.msra.mxu0 0
        %1834 = vmatprep.subr.bf16.mxu0 0
        %1835 = vmatpush1.bf16.msra.mxu0 0
        %1836 = vmatprep.subr.bf16.mxu0 0
        %1837 = vmatpush1.bf16.msra.mxu0 0
        %1838 = vmatprep.subr.bf16.mxu0 0
        %1839 = vmatpush1.bf16.msra.mxu0 0
        %1840 = vmatprep.subr.bf16.mxu0 0
        %1841 = vmatpush1.bf16.msra.mxu0 0
        %1842 = vmatprep.subr.bf16.mxu0 0
        %1843 = vmatpush1.bf16.msra.mxu0 0
        %1844 = vmatprep.subr.bf16.mxu0 0
        %1845 = vmatpush1.bf16.msra.mxu0 0
        %1846 = vmatprep.subr.bf16.mxu0 0
        %1847 = vmatpush1.bf16.msra.mxu0 0
        %1848 = vmatprep.mubr.bf16.mxu0 0
        %1849 = vmatmul.mubr.bf16.gmra.mrb[0].mxu0 %v1752
        %v1850 = vpop.f32.mrb[0].mxu0
        %v1851 = vadd.f32 0.0, %v1850
        %v1852 = vpop.f32.mrb[0].mxu0
        %v1853 = vpop.f32.mrb[0].mxu0
        %v1854 = vadd.f32 0.0, %v1853
        %v1855 = vpop.f32.mrb[0].mxu0
        %1856 = vmatprep.mubr.bf16.mxu0 0
        %1857 = vmatmul.mubr.bf16.gmra.mrb[0].mxu0 %v1753
        %v1858 = vpop.f32.mrb[0].mxu0
        %v1859 = vadd.f32 0.0, %v1858
        %v1860 = vpop.f32.mrb[0].mxu0
        %v1861 = vpop.f32.mrb[0].mxu0
        %v1862 = vadd.f32 0.0, %v1861
        %v1863 = vpop.f32.mrb[0].mxu0
        %1864 = vmatprep.mubr.bf16.mxu0 0
        %1865 = vmatmul.mubr.bf16.gmra.mrb[0].mxu0 %v1754
        %v1866 = vpop.f32.mrb[0].mxu0
        %v1867 = vadd.f32 0.0, %v1866
        %v1868 = vpop.f32.mrb[0].mxu0
        %v1869 = vpop.f32.mrb[0].mxu0
        %v1870 = vadd.f32 0.0, %v1869
        %v1871 = vpop.f32.mrb[0].mxu0
        %1872 = vmatprep.mubr.bf16.mxu0 0
        %1873 = vmatmul.mubr.bf16.gmra.mrb[0].mxu0 %v1755
        %v1874 = vpop.f32.mrb[0].mxu0
        %v1875 = vadd.f32 0.0, %v1874
        %v1876 = vpop.f32.mrb[0].mxu0
        %v1877 = vpop.f32.mrb[0].mxu0
        %v1878 = vadd.f32 0.0, %v1877
        %v1879 = vpop.f32.mrb[0].mxu0
        %1880 = vmatprep.mubr.bf16.mxu0 0
        %1881 = vmatmul.mubr.bf16.gmra.mrb[0].mxu0 %v1756
        %v1882 = vpop.f32.mrb[0].mxu0
        %v1883 = vadd.f32 0.0, %v1882
        %v1884 = vpop.f32.mrb[0].mxu0
        %v1885 = vpop.f32.mrb[0].mxu0
        %v1886 = vadd.f32 0.0, %v1885
        %v1887 = vpop.f32.mrb[0].mxu0
        %1888 = vmatprep.mubr.bf16.mxu0 0
        %1889 = vmatmul.mubr.bf16.gmra.mrb[0].mxu0 %v1757
        %v1890 = vpop.f32.mrb[0].mxu0
        %v1891 = vadd.f32 0.0, %v1890
        %v1892 = vpop.f32.mrb[0].mxu0
        %v1893 = vpop.f32.mrb[0].mxu0
        %v1894 = vadd.f32 0.0, %v1893
        %v1895 = vpop.f32.mrb[0].mxu0
        %1896 = vmatprep.mubr.bf16.mxu0 0
        %1897 = vmatmul.mubr.bf16.gmra.mrb[0].mxu0 %v1758
        %v1898 = vpop.f32.mrb[0].mxu0
        %v1899 = vadd.f32 0.0, %v1898
        %v1900 = vpop.f32.mrb[0].mxu0
        %v1901 = vpop.f32.mrb[0].mxu0
        %v1902 = vadd.f32 0.0, %v1901
        %v1903 = vpop.f32.mrb[0].mxu0
        %1904 = vmatprep.mubr.bf16.mxu0 0
        %1905 = vmatmul.mubr.bf16.gmra.mrb[0].mxu0 %v1759
        %v1906 = vpop.f32.mrb[0].mxu0
        %v1907 = vadd.f32 0.0, %v1906
        %v1908 = vpop.f32.mrb[0].mxu0
        %v1909 = vpop.f32.mrb[0].mxu0
        %v1910 = vadd.f32 0.0, %v1909
        %v1911 = vpop.f32.mrb[0].mxu0
        %1912 = vdwg.mxu0
        %v1913 = vadd.f32 %v1672, %v1851
        %v1914 = vadd.f32 %v1673, %v1854
        %v1915 = vadd.f32 %v1674, %v1859
        %v1916 = vadd.f32 %v1675, %v1862
        %v1917 = vadd.f32 %v1676, %v1867
        %v1918 = vadd.f32 %v1677, %v1870
        %v1919 = vadd.f32 %v1678, %v1875
        %v1920 = vadd.f32 %v1679, %v1878
        %v1921 = vadd.f32 %v1680, %v1883
        %v1922 = vadd.f32 %v1681, %v1886
        %v1923 = vadd.f32 %v1682, %v1891
        %v1924 = vadd.f32 %v1683, %v1894
        %v1925 = vadd.f32 %v1684, %v1899
        %v1926 = vadd.f32 %v1685, %v1902
        %v1927 = vadd.f32 %v1686, %v1907
        %v1928 = vadd.f32 %v1687, %v1910
        %v1929 = vmul.bf16 %v835, %v835
        %v1930 = vmul.bf16 %v836, %v836
        %v1931 = vmul.bf16 %v837, %v837
        %v1932 = vmul.bf16 %v838, %v838
        %v1933 = vmul.bf16 %v839, %v839
        %v1934 = vmul.bf16 %v840, %v840
        %v1935 = vmul.bf16 %v841, %v841
        %v1936 = vmul.bf16 %v842, %v842
        %v1937 = vld [vmem:[#allocation10 + $0x100] sm:$0xf]
        %v1938 = vld [vmem:[#allocation10 + $0x104] sm:$0xf]
        %v1939 = vld [vmem:[#allocation10 + $0x108] sm:$0xf]
        %v1940 = vld [vmem:[#allocation10 + $0x10c] sm:$0xf]
        %v1941 = vld [vmem:[#allocation10 + $0x110] sm:$0xf]
        %v1942 = vld [vmem:[#allocation10 + $0x114] sm:$0xf]
        %v1943 = vld [vmem:[#allocation10 + $0x118] sm:$0xf]
        %v1944 = vld [vmem:[#allocation10 + $0x11c] sm:$0xf]
        %v1945 = vld [vmem:[#allocation10 + $0x120] sm:$0xf]
        %v1946 = vld [vmem:[#allocation10 + $0x124] sm:$0xf]
        %v1947 = vld [vmem:[#allocation10 + $0x128] sm:$0xf]
        %v1948 = vld [vmem:[#allocation10 + $0x12c] sm:$0xf]
        %v1949 = vld [vmem:[#allocation10 + $0x130] sm:$0xf]
        %v1950 = vld [vmem:[#allocation10 + $0x134] sm:$0xf]
        %v1951 = vld [vmem:[#allocation10 + $0x138] sm:$0xf]
        %v1952 = vld [vmem:[#allocation10 + $0x13c] sm:$0xf]
        %v1969 = vunpack.c.l.b16 %v1937
        %v1970 = vunpack.c.l.b16 %v1938
        %v1971 = vunpack.c.l.b16 %v1939
        %v1972 = vunpack.c.l.b16 %v1940
        %v1973 = vunpack.c.l.b16 %v1941
        %v1974 = vunpack.c.l.b16 %v1942
        %v1975 = vunpack.c.l.b16 %v1943
        %v1976 = vunpack.c.l.b16 %v1944
        %v1977 = vunpack.c.l.b16 %v1945
        %v1978 = vunpack.c.l.b16 %v1946
        %v1979 = vunpack.c.l.b16 %v1947
        %v1980 = vunpack.c.l.b16 %v1948
        %v1981 = vunpack.c.l.b16 %v1949
        %v1982 = vunpack.c.l.b16 %v1950
        %v1983 = vunpack.c.l.b16 %v1951
        %v1984 = vunpack.c.l.b16 %v1952
        %v1985 = vpack.c.b16 %v1970, %v1969
        %v1986 = vpack.c.b16 %v1972, %v1971
        %v1987 = vpack.c.b16 %v1974, %v1973
        %v1988 = vpack.c.b16 %v1976, %v1975
        %v1989 = vpack.c.b16 %v1978, %v1977
        %v1990 = vpack.c.b16 %v1980, %v1979
        %v1991 = vpack.c.b16 %v1982, %v1981
        %v1992 = vpack.c.b16 %v1984, %v1983
        %2001 = vmatprep.subr.bf16.mxu0 0
        %2002 = vmatpush1.bf16.msra.mxu0 %v1985
        %2003 = vmatprep.subr.bf16.mxu0 0
        %2004 = vmatpush1.bf16.msra.mxu0 %v1986
        %2005 = vmatprep.subr.bf16.mxu0 0
        %2006 = vmatpush1.bf16.msra.mxu0 %v1987
        %2007 = vmatprep.subr.bf16.mxu0 0
        %2008 = vmatpush1.bf16.msra.mxu0 %v1988
        %2009 = vmatprep.subr.bf16.mxu0 0
        %2010 = vmatpush1.bf16.msra.mxu0 %v1989
        %2011 = vmatprep.subr.bf16.mxu0 0
        %2012 = vmatpush1.bf16.msra.mxu0 %v1990
        %2013 = vmatprep.subr.bf16.mxu0 0
        %2014 = vmatpush1.bf16.msra.mxu0 %v1991
        %2015 = vmatprep.subr.bf16.mxu0 0
        %2016 = vmatpush1.bf16.msra.mxu0 %v1992
        %2017 = vmatprep.subr.bf16.mxu0 0
        %2018 = vmatpush1.bf16.msra.mxu0 0
        %2019 = vmatprep.subr.bf16.mxu0 0
        %2020 = vmatpush1.bf16.msra.mxu0 0
        %2021 = vmatprep.subr.bf16.mxu0 0
        %2022 = vmatpush1.bf16.msra.mxu0 0
        %2023 = vmatprep.subr.bf16.mxu0 0
        %2024 = vmatpush1.bf16.msra.mxu0 0
        %2025 = vmatprep.subr.bf16.mxu0 0
        %2026 = vmatpush1.bf16.msra.mxu0 0
        %2027 = vmatprep.subr.bf16.mxu0 0
        %2028 = vmatpush1.bf16.msra.mxu0 0
        %2029 = vmatprep.subr.bf16.mxu0 0
        %2030 = vmatpush1.bf16.msra.mxu0 0
        %2031 = vmatprep.subr.bf16.mxu0 0
        %2032 = vmatpush1.bf16.msra.mxu0 0
        %2033 = vmatprep.mubr.bf16.mxu0 0
        %2034 = vmatmul.mubr.bf16.gmra.mrb[0].mxu0 %v1929
        %v2035 = vpop.f32.mrb[0].mxu0
        %v2036 = vadd.f32 0.0, %v2035
        %v2037 = vpop.f32.mrb[0].mxu0
        %v2038 = vpop.f32.mrb[0].mxu0
        %v2039 = vadd.f32 0.0, %v2038
        %v2040 = vpop.f32.mrb[0].mxu0
        %2041 = vmatprep.mubr.bf16.mxu0 0
        %2042 = vmatmul.mubr.bf16.gmra.mrb[0].mxu0 %v1930
        %v2043 = vpop.f32.mrb[0].mxu0
        %v2044 = vadd.f32 0.0, %v2043
        %v2045 = vpop.f32.mrb[0].mxu0
        %v2046 = vpop.f32.mrb[0].mxu0
        %v2047 = vadd.f32 0.0, %v2046
        %v2048 = vpop.f32.mrb[0].mxu0
        %2049 = vmatprep.mubr.bf16.mxu0 0
        %2050 = vmatmul.mubr.bf16.gmra.mrb[0].mxu0 %v1931
        %v2051 = vpop.f32.mrb[0].mxu0
        %v2052 = vadd.f32 0.0, %v2051
        %v2053 = vpop.f32.mrb[0].mxu0
        %v2054 = vpop.f32.mrb[0].mxu0
        %v2055 = vadd.f32 0.0, %v2054
        %v2056 = vpop.f32.mrb[0].mxu0
        %2057 = vmatprep.mubr.bf16.mxu0 0
        %2058 = vmatmul.mubr.bf16.gmra.mrb[0].mxu0 %v1932
        %v2059 = vpop.f32.mrb[0].mxu0
        %v2060 = vadd.f32 0.0, %v2059
        %v2061 = vpop.f32.mrb[0].mxu0
        %v2062 = vpop.f32.mrb[0].mxu0
        %v2063 = vadd.f32 0.0, %v2062
        %v2064 = vpop.f32.mrb[0].mxu0
        %2065 = vmatprep.mubr.bf16.mxu0 0
        %2066 = vmatmul.mubr.bf16.gmra.mrb[0].mxu0 %v1933
        %v2067 = vpop.f32.mrb[0].mxu0
        %v2068 = vadd.f32 0.0, %v2067
        %v2069 = vpop.f32.mrb[0].mxu0
        %v2070 = vpop.f32.mrb[0].mxu0
        %v2071 = vadd.f32 0.0, %v2070
        %v2072 = vpop.f32.mrb[0].mxu0
        %2073 = vmatprep.mubr.bf16.mxu0 0
        %2074 = vmatmul.mubr.bf16.gmra.mrb[0].mxu0 %v1934
        %v2075 = vpop.f32.mrb[0].mxu0
        %v2076 = vadd.f32 0.0, %v2075
        %v2077 = vpop.f32.mrb[0].mxu0
        %v2078 = vpop.f32.mrb[0].mxu0
        %v2079 = vadd.f32 0.0, %v2078
        %v2080 = vpop.f32.mrb[0].mxu0
        %2081 = vmatprep.mubr.bf16.mxu0 0
        %2082 = vmatmul.mubr.bf16.gmra.mrb[0].mxu0 %v1935
        %v2083 = vpop.f32.mrb[0].mxu0
        %v2084 = vadd.f32 0.0, %v2083
        %v2085 = vpop.f32.mrb[0].mxu0
        %v2086 = vpop.f32.mrb[0].mxu0
        %v2087 = vadd.f32 0.0, %v2086
        %v2088 = vpop.f32.mrb[0].mxu0
        %2089 = vmatprep.mubr.bf16.mxu0 0
        %2090 = vmatmul.mubr.bf16.gmra.mrb[0].mxu0 %v1936
        %v2091 = vpop.f32.mrb[0].mxu0
        %v2092 = vadd.f32 0.0, %v2091
        %v2093 = vpop.f32.mrb[0].mxu0
        %v2094 = vpop.f32.mrb[0].mxu0
        %v2095 = vadd.f32 0.0, %v2094
        %v2096 = vpop.f32.mrb[0].mxu0
        %2097 = vdwg.mxu0
        %v2098 = vadd.f32 %v1913, %v2036
        %v2099 = vadd.f32 %v1914, %v2039
        %v2100 = vadd.f32 %v1915, %v2044
        %v2101 = vadd.f32 %v1916, %v2047
        %v2102 = vadd.f32 %v1917, %v2052
        %v2103 = vadd.f32 %v1918, %v2055
        %v2104 = vadd.f32 %v1919, %v2060
        %v2105 = vadd.f32 %v1920, %v2063
        %v2106 = vadd.f32 %v1921, %v2068
        %v2107 = vadd.f32 %v1922, %v2071
        %v2108 = vadd.f32 %v1923, %v2076
        %v2109 = vadd.f32 %v1924, %v2079
        %v2110 = vadd.f32 %v1925, %v2084
        %v2111 = vadd.f32 %v1926, %v2087
        %v2112 = vadd.f32 %v1927, %v2092
        %v2113 = vadd.f32 %v1928, %v2095
        %v2114 = vmul.bf16 %v1181, %v1181
        %v2115 = vmul.bf16 %v1182, %v1182
        %v2116 = vmul.bf16 %v1183, %v1183
        %v2117 = vmul.bf16 %v1184, %v1184
        %v2118 = vmul.bf16 %v1185, %v1185
        %v2119 = vmul.bf16 %v1186, %v1186
        %v2120 = vmul.bf16 %v1187, %v1187
        %v2121 = vmul.bf16 %v1188, %v1188
        %v2122 = vld [vmem:[#allocation10 + $0x140] sm:$0xf]
        %v2123 = vld [vmem:[#allocation10 + $0x144] sm:$0xf]
        %v2124 = vld [vmem:[#allocation10 + $0x148] sm:$0xf]
        %v2125 = vld [vmem:[#allocation10 + $0x14c] sm:$0xf]
        %v2126 = vld [vmem:[#allocation10 + $0x150] sm:$0xf]
        %v2127 = vld [vmem:[#allocation10 + $0x154] sm:$0xf]
        %v2128 = vld [vmem:[#allocation10 + $0x158] sm:$0xf]
        %v2129 = vld [vmem:[#allocation10 + $0x15c] sm:$0xf]
        %v2130 = vld [vmem:[#allocation10 + $0x160] sm:$0xf]
        %v2131 = vld [vmem:[#allocation10 + $0x164] sm:$0xf]
        %v2132 = vld [vmem:[#allocation10 + $0x168] sm:$0xf]
        %v2133 = vld [vmem:[#allocation10 + $0x16c] sm:$0xf]
        %v2134 = vld [vmem:[#allocation10 + $0x170] sm:$0xf]
        %v2135 = vld [vmem:[#allocation10 + $0x174] sm:$0xf]
        %v2136 = vld [vmem:[#allocation10 + $0x178] sm:$0xf]
        %v2137 = vld [vmem:[#allocation10 + $0x17c] sm:$0xf]
        %v2154 = vunpack.c.l.b16 %v2122
        %v2155 = vunpack.c.l.b16 %v2123
        %v2156 = vunpack.c.l.b16 %v2124
        %v2157 = vunpack.c.l.b16 %v2125
        %v2158 = vunpack.c.l.b16 %v2126
        %v2159 = vunpack.c.l.b16 %v2127
        %v2160 = vunpack.c.l.b16 %v2128
        %v2161 = vunpack.c.l.b16 %v2129
        %v2162 = vunpack.c.l.b16 %v2130
        %v2163 = vunpack.c.l.b16 %v2131
        %v2164 = vunpack.c.l.b16 %v2132
        %v2165 = vunpack.c.l.b16 %v2133
        %v2166 = vunpack.c.l.b16 %v2134
        %v2167 = vunpack.c.l.b16 %v2135
        %v2168 = vunpack.c.l.b16 %v2136
        %v2169 = vunpack.c.l.b16 %v2137
        %v2170 = vpack.c.b16 %v2155, %v2154
        %v2171 = vpack.c.b16 %v2157, %v2156
        %v2172 = vpack.c.b16 %v2159, %v2158
        %v2173 = vpack.c.b16 %v2161, %v2160
        %v2174 = vpack.c.b16 %v2163, %v2162
        %v2175 = vpack.c.b16 %v2165, %v2164
        %v2176 = vpack.c.b16 %v2167, %v2166
        %v2177 = vpack.c.b16 %v2169, %v2168
        %2186 = vmatprep.subr.bf16.mxu0 0
        %2187 = vmatpush1.bf16.msra.mxu0 %v2170
        %2188 = vmatprep.subr.bf16.mxu0 0
        %2189 = vmatpush1.bf16.msra.mxu0 %v2171
        %2190 = vmatprep.subr.bf16.mxu0 0
        %2191 = vmatpush1.bf16.msra.mxu0 %v2172
        %2192 = vmatprep.subr.bf16.mxu0 0
        %2193 = vmatpush1.bf16.msra.mxu0 %v2173
        %2194 = vmatprep.subr.bf16.mxu0 0
        %2195 = vmatpush1.bf16.msra.mxu0 %v2174
        %2196 = vmatprep.subr.bf16.mxu0 0
        %2197 = vmatpush1.bf16.msra.mxu0 %v2175
        %2198 = vmatprep.subr.bf16.mxu0 0
        %2199 = vmatpush1.bf16.msra.mxu0 %v2176
        %2200 = vmatprep.subr.bf16.mxu0 0
        %2201 = vmatpush1.bf16.msra.mxu0 %v2177
        %2202 = vmatprep.subr.bf16.mxu0 0
        %2203 = vmatpush1.bf16.msra.mxu0 0
        %2204 = vmatprep.subr.bf16.mxu0 0
        %2205 = vmatpush1.bf16.msra.mxu0 0
        %2206 = vmatprep.subr.bf16.mxu0 0
        %2207 = vmatpush1.bf16.msra.mxu0 0
        %2208 = vmatprep.subr.bf16.mxu0 0
        %2209 = vmatpush1.bf16.msra.mxu0 0
        %2210 = vmatprep.subr.bf16.mxu0 0
        %2211 = vmatpush1.bf16.msra.mxu0 0
        %2212 = vmatprep.subr.bf16.mxu0 0
        %2213 = vmatpush1.bf16.msra.mxu0 0
        %2214 = vmatprep.subr.bf16.mxu0 0
        %2215 = vmatpush1.bf16.msra.mxu0 0
        %2216 = vmatprep.subr.bf16.mxu0 0
        %2217 = vmatpush1.bf16.msra.mxu0 0
        %2218 = vmatprep.mubr.bf16.mxu0 0
        %2219 = vmatmul.mubr.bf16.gmra.mrb[0].mxu0 %v2114
        %v2220 = vpop.f32.mrb[0].mxu0
        %v2221 = vadd.f32 0.0, %v2220
        %v2222 = vpop.f32.mrb[0].mxu0
        %v2223 = vpop.f32.mrb[0].mxu0
        %v2224 = vadd.f32 0.0, %v2223
        %v2225 = vpop.f32.mrb[0].mxu0
        %2226 = vmatprep.mubr.bf16.mxu0 0
        %2227 = vmatmul.mubr.bf16.gmra.mrb[0].mxu0 %v2115
        %v2228 = vpop.f32.mrb[0].mxu0
        %v2229 = vadd.f32 0.0, %v2228
        %v2230 = vpop.f32.mrb[0].mxu0
        %v2231 = vpop.f32.mrb[0].mxu0
        %v2232 = vadd.f32 0.0, %v2231
        %v2233 = vpop.f32.mrb[0].mxu0
        %2234 = vmatprep.mubr.bf16.mxu0 0
        %2235 = vmatmul.mubr.bf16.gmra.mrb[0].mxu0 %v2116
        %v2236 = vpop.f32.mrb[0].mxu0
        %v2237 = vadd.f32 0.0, %v2236
        %v2238 = vpop.f32.mrb[0].mxu0
        %v2239 = vpop.f32.mrb[0].mxu0
        %v2240 = vadd.f32 0.0, %v2239
        %v2241 = vpop.f32.mrb[0].mxu0
        %2242 = vmatprep.mubr.bf16.mxu0 0
        %2243 = vmatmul.mubr.bf16.gmra.mrb[0].mxu0 %v2117
        %v2244 = vpop.f32.mrb[0].mxu0
        %v2245 = vadd.f32 0.0, %v2244
        %v2246 = vpop.f32.mrb[0].mxu0
        %v2247 = vpop.f32.mrb[0].mxu0
        %v2248 = vadd.f32 0.0, %v2247
        %v2249 = vpop.f32.mrb[0].mxu0
        %2250 = vmatprep.mubr.bf16.mxu0 0
        %2251 = vmatmul.mubr.bf16.gmra.mrb[0].mxu0 %v2118
        %v2252 = vpop.f32.mrb[0].mxu0
        %v2253 = vadd.f32 0.0, %v2252
        %v2254 = vpop.f32.mrb[0].mxu0
        %v2255 = vpop.f32.mrb[0].mxu0
        %v2256 = vadd.f32 0.0, %v2255
        %v2257 = vpop.f32.mrb[0].mxu0
        %2258 = vmatprep.mubr.bf16.mxu0 0
        %2259 = vmatmul.mubr.bf16.gmra.mrb[0].mxu0 %v2119
        %v2260 = vpop.f32.mrb[0].mxu0
        %v2261 = vadd.f32 0.0, %v2260
        %v2262 = vpop.f32.mrb[0].mxu0
        %v2263 = vpop.f32.mrb[0].mxu0
        %v2264 = vadd.f32 0.0, %v2263
        %v2265 = vpop.f32.mrb[0].mxu0
        %2266 = vmatprep.mubr.bf16.mxu0 0
        %2267 = vmatmul.mubr.bf16.gmra.mrb[0].mxu0 %v2120
        %v2268 = vpop.f32.mrb[0].mxu0
        %v2269 = vadd.f32 0.0, %v2268
        %v2270 = vpop.f32.mrb[0].mxu0
        %v2271 = vpop.f32.mrb[0].mxu0
        %v2272 = vadd.f32 0.0, %v2271
        %v2273 = vpop.f32.mrb[0].mxu0
        %2274 = vmatprep.mubr.bf16.mxu0 0
        %2275 = vmatmul.mubr.bf16.gmra.mrb[0].mxu0 %v2121
        %v2276 = vpop.f32.mrb[0].mxu0
        %v2277 = vadd.f32 0.0, %v2276
        %v2278 = vpop.f32.mrb[0].mxu0
        %v2279 = vpop.f32.mrb[0].mxu0
        %v2280 = vadd.f32 0.0, %v2279
        %v2281 = vpop.f32.mrb[0].mxu0
        %2282 = vdwg.mxu0
        %v2283 = vadd.f32 %v2098, %v2221
        %v2284 = vadd.f32 %v2099, %v2224
        %v2285 = vadd.f32 %v2100, %v2229
        %v2286 = vadd.f32 %v2101, %v2232
        %v2287 = vadd.f32 %v2102, %v2237
        %v2288 = vadd.f32 %v2103, %v2240
        %v2289 = vadd.f32 %v2104, %v2245
        %v2290 = vadd.f32 %v2105, %v2248
        %v2291 = vadd.f32 %v2106, %v2253
        %v2292 = vadd.f32 %v2107, %v2256
        %v2293 = vadd.f32 %v2108, %v2261
        %v2294 = vadd.f32 %v2109, %v2264
        %v2295 = vadd.f32 %v2110, %v2269
        %v2296 = vadd.f32 %v2111, %v2272
        %v2297 = vadd.f32 %v2112, %v2277
        %v2298 = vadd.f32 %v2113, %v2280
        %v2307 = vunpack.c.l.b16 %v835
        %v2308 = vunpack.c.h.b16 %v835
        %v2309 = vunpack.c.l.b16 %v836
        %v2310 = vunpack.c.h.b16 %v836
        %v2311 = vunpack.c.l.b16 %v837
        %v2312 = vunpack.c.h.b16 %v837
        %v2313 = vunpack.c.l.b16 %v838
        %v2314 = vunpack.c.h.b16 %v838
        %v2315 = vunpack.c.l.b16 %v839
        %v2316 = vunpack.c.h.b16 %v839
        %v2317 = vunpack.c.l.b16 %v840
        %v2318 = vunpack.c.h.b16 %v840
        %v2319 = vunpack.c.l.b16 %v841
        %v2320 = vunpack.c.h.b16 %v841
        %v2321 = vunpack.c.l.b16 %v842
        %v2322 = vunpack.c.h.b16 %v842
        %v2323 = vpack.c.b16 %v2307, %v2307
        %v2324 = vpack.c.b16 %v2308, %v2308
        %v2325 = vpack.c.b16 %v2309, %v2309
        %v2326 = vpack.c.b16 %v2310, %v2310
        %v2327 = vpack.c.b16 %v2311, %v2311
        %v2328 = vpack.c.b16 %v2312, %v2312
        %v2329 = vpack.c.b16 %v2313, %v2313
        %v2330 = vpack.c.b16 %v2314, %v2314
        %v2331 = vpack.c.b16 %v2315, %v2315
        %v2332 = vpack.c.b16 %v2316, %v2316
        %v2333 = vpack.c.b16 %v2317, %v2317
        %v2334 = vpack.c.b16 %v2318, %v2318
        %v2335 = vpack.c.b16 %v2319, %v2319
        %v2336 = vpack.c.b16 %v2320, %v2320
        %v2337 = vpack.c.b16 %v2321, %v2321
        %v2338 = vpack.c.b16 %v2322, %v2322
        %2355 = vst [vmem:[%s356] sm:$0xf] %v2323
        %2356 = vst [vmem:[%s356 + $0x4] sm:$0xf] %v2324
        %2357 = vst [vmem:[%s356 + $0x8] sm:$0xf] %v2325
        %2358 = vst [vmem:[%s356 + $0xc] sm:$0xf] %v2326
        %2359 = vst [vmem:[%s356 + $0x10] sm:$0xf] %v2327
        %2360 = vst [vmem:[%s356 + $0x14] sm:$0xf] %v2328
        %2361 = vst [vmem:[%s356 + $0x18] sm:$0xf] %v2329
        %2362 = vst [vmem:[%s356 + $0x1c] sm:$0xf] %v2330
        %2363 = vst [vmem:[%s356 + $0x20] sm:$0xf] %v2331
        %2364 = vst [vmem:[%s356 + $0x24] sm:$0xf] %v2332
        %2365 = vst [vmem:[%s356 + $0x28] sm:$0xf] %v2333
        %2366 = vst [vmem:[%s356 + $0x2c] sm:$0xf] %v2334
        %2367 = vst [vmem:[%s356 + $0x30] sm:$0xf] %v2335
        %2368 = vst [vmem:[%s356 + $0x34] sm:$0xf] %v2336
        %2369 = vst [vmem:[%s356 + $0x38] sm:$0xf] %v2337
        %2370 = vst [vmem:[%s356 + $0x3c] sm:$0xf] %v2338
        %v2371 = vtanh.pop %v2283
        %v2372 = vtanh.pop %v2284
        %v2373 = vtanh.pop %v2285
        %v2374 = vtanh.pop %v2286
        %v2375 = vtanh.pop %v2287
        %v2376 = vtanh.pop %v2288
        %v2377 = vtanh.pop %v2289
        %v2378 = vtanh.pop %v2290
        %v2379 = vtanh.pop %v2291
        %v2380 = vtanh.pop %v2292
        %v2381 = vtanh.pop %v2293
        %v2382 = vtanh.pop %v2294
        %v2383 = vtanh.pop %v2295
        %v2384 = vtanh.pop %v2296
        %v2385 = vtanh.pop %v2297
        %v2386 = vtanh.pop %v2298
        %v2387 = vpack.c.bf16 %v2372, %v2371
        %v2388 = vpack.c.bf16 %v2374, %v2373
        %v2389 = vpack.c.bf16 %v2376, %v2375
        %v2390 = vpack.c.bf16 %v2378, %v2377
        %v2391 = vpack.c.bf16 %v2380, %v2379
        %v2392 = vpack.c.bf16 %v2382, %v2381
        %v2393 = vpack.c.bf16 %v2384, %v2383
        %v2394 = vpack.c.bf16 %v2386, %v2385
        %v2403 = vunpack.c.l.b16 %v2387
        %v2404 = vunpack.c.h.b16 %v2387
        %v2405 = vunpack.c.l.b16 %v2388
        %v2406 = vunpack.c.h.b16 %v2388
        %v2407 = vunpack.c.l.b16 %v2389
        %v2408 = vunpack.c.h.b16 %v2389
        %v2409 = vunpack.c.l.b16 %v2390
        %v2410 = vunpack.c.h.b16 %v2390
        %v2411 = vunpack.c.l.b16 %v2391
        %v2412 = vunpack.c.h.b16 %v2391
        %v2413 = vunpack.c.l.b16 %v2392
        %v2414 = vunpack.c.h.b16 %v2392
        %v2415 = vunpack.c.l.b16 %v2393
        %v2416 = vunpack.c.h.b16 %v2393
        %v2417 = vunpack.c.l.b16 %v2394
        %v2418 = vunpack.c.h.b16 %v2394
        %v2419 = vpack.c.b16 %v2403, %v2403
        %v2420 = vpack.c.b16 %v2404, %v2404
        %v2421 = vpack.c.b16 %v2405, %v2405
        %v2422 = vpack.c.b16 %v2406, %v2406
        %v2423 = vpack.c.b16 %v2407, %v2407
        %v2424 = vpack.c.b16 %v2408, %v2408
        %v2425 = vpack.c.b16 %v2409, %v2409
        %v2426 = vpack.c.b16 %v2410, %v2410
        %v2427 = vpack.c.b16 %v2411, %v2411
        %v2428 = vpack.c.b16 %v2412, %v2412
        %v2429 = vpack.c.b16 %v2413, %v2413
        %v2430 = vpack.c.b16 %v2414, %v2414
        %v2431 = vpack.c.b16 %v2415, %v2415
        %v2432 = vpack.c.b16 %v2416, %v2416
        %v2433 = vpack.c.b16 %v2417, %v2417
        %v2434 = vpack.c.b16 %v2418, %v2418
        %2451 = vst [vmem:[%s363] sm:$0xf] %v2419
        %2452 = vst [vmem:[%s363 + $0x4] sm:$0xf] %v2420
        %2453 = vst [vmem:[%s363 + $0x8] sm:$0xf] %v2421
        %2454 = vst [vmem:[%s363 + $0xc] sm:$0xf] %v2422
        %2455 = vst [vmem:[%s363 + $0x10] sm:$0xf] %v2423
        %2456 = vst [vmem:[%s363 + $0x14] sm:$0xf] %v2424
        %2457 = vst [vmem:[%s363 + $0x18] sm:$0xf] %v2425
        %2458 = vst [vmem:[%s363 + $0x1c] sm:$0xf] %v2426
        %2459 = vst [vmem:[%s363 + $0x20] sm:$0xf] %v2427
        %2460 = vst [vmem:[%s363 + $0x24] sm:$0xf] %v2428
        %2461 = vst [vmem:[%s363 + $0x28] sm:$0xf] %v2429
        %2462 = vst [vmem:[%s363 + $0x2c] sm:$0xf] %v2430
        %2463 = vst [vmem:[%s363 + $0x30] sm:$0xf] %v2431
        %2464 = vst [vmem:[%s363 + $0x34] sm:$0xf] %v2432
        %2465 = vst [vmem:[%s363 + $0x38] sm:$0xf] %v2433
        %2466 = vst [vmem:[%s363 + $0x3c] sm:$0xf] %v2434
        %s2467 = sand.u32 %s154, 1
        %s2468 = scalar_lea.sflag [#allocation4], %s2467
        %s2469 = sand.u32 %s154, 1
        %s2470 = smul.addr %s2469, 64
        %s2471 = scalar_lea.vmem [#allocation11], %s2470
        %s2472 = sand.u32 %s180, 1
        %s2473 = scalar_lea.sflag [#allocation13], %s2472
        %s2474 = sand.u32 %s180, 1
        %s2475 = smul.addr %s2474, 64
        %s2476 = scalar_lea.vmem [#allocation12], %s2475
        // Predicated region
        $region61: #{tpu_custom_call.1} parent=39 // pred_check
          %p2477 = pneg %p164
        $region62: #{tpu_custom_call.1} parent=39 // pred_check_branch
          %2479 = sbr.rel (%p2477) target = $region64
        $region63: #{tpu_custom_call.1} parent=39 // pred_region
          %s2480 = smul.u32 16, %s31
          %s2482 = ssub.s32 1024, 1024
          %2483 = vsyncadd %s2468, %s2482
          %s2484 = smul.addr %s2480, 64
          %s2485 = scalar_lea.hbm %s5, %s2484
          %s2486 = sshll.u32 %s2471, 4
          %s2487 = int_to_ptr.vmem [resolvable:$true] %s2486
          %2492 = dma.vmem_to_hbm [thread:$0]  %s2487, 1024, %s2485, %s2468, 64, 64, 4
        $region64: #{tpu_custom_call.1} parent=39 // pred_fallthru
          _
        // Predicated region
        $region65: #{tpu_custom_call.1} parent=39 // pred_check
          %p2493 = pneg %p190
        $region66: #{tpu_custom_call.1} parent=39 // pred_check_branch
          %2495 = sbr.rel (%p2493) target = $region68
        $region67: #{tpu_custom_call.1} parent=39 // pred_region
          %s2496 = smul.u32 16, %s31
          %s2498 = ssub.s32 1024, 1024
          %2499 = vsyncadd %s2473, %s2498
          %s2500 = smul.addr %s2496, 64
          %s2501 = scalar_lea.hbm %s6, %s2500
          %s2502 = sshll.u32 %s2476, 4
          %s2503 = int_to_ptr.vmem [resolvable:$true] %s2502
          %2508 = dma.vmem_to_hbm [thread:$0]  %s2503, 1024, %s2501, %s2473, 64, 64, 4
        $region68: #{tpu_custom_call.1} parent=39 // pred_fallthru
          _
      $region40: #{tpu_custom_call.1} parent=5 // pred_fallthru
        _
      %p2509 = scmp.le.s32.totalorder 2, %s26
      // Predicated region
      $region69: #{tpu_custom_call.1} parent=5 // pred_check
        %p2510 = pneg %p2509
      $region70: #{tpu_custom_call.1} parent=5 // pred_check_branch
        %2512 = sbr.rel (%p2510) target = $region72
      $region71: #{tpu_custom_call.1} parent=5 // pred_region
        %s2513 = ssub.s32 %s26, 2
        // Predicated region
        $region73: #{tpu_custom_call.1} parent=71 // pred_check
          %p2514 = pneg %p170
        $region74: #{tpu_custom_call.1} parent=71 // pred_check_branch
          %2516 = sbr.rel (%p2514) target = $region76
        $region75: #{tpu_custom_call.1} parent=71 // pred_region
          %s2517 = sand.u32 %s155, 1
          %s2518 = scalar_lea.sflag [#allocation4], %s2517
          %s2519 = sand.u32 %s155, 1
          %s2520 = smul.addr %s2519, 64
          %s2521 = scalar_lea.vmem [#allocation11], %s2520
          %2522 = dma.done %s2518, 1024
        $region76: #{tpu_custom_call.1} parent=71 // pred_fallthru
          _
        // Predicated region
        $region77: #{tpu_custom_call.1} parent=71 // pred_check
          %p2523 = pneg %p196
        $region78: #{tpu_custom_call.1} parent=71 // pred_check_branch
          %2525 = sbr.rel (%p2523) target = $region80
        $region79: #{tpu_custom_call.1} parent=71 // pred_region
          %s2526 = sand.u32 %s181, 1
          %s2527 = scalar_lea.sflag [#allocation13], %s2526
          %s2528 = sand.u32 %s181, 1
          %s2529 = smul.addr %s2528, 64
          %s2530 = scalar_lea.vmem [#allocation12], %s2529
          %2531 = dma.done %s2527, 1024
        $region80: #{tpu_custom_call.1} parent=71 // pred_fallthru
          _
      $region72: #{tpu_custom_call.1} parent=5 // pred_fallthru
        _
    $region6: #{tpu_custom_call.1} parent=1 // loop_footer
      %s30 = sadd.s32 1, %s26
    $region7: #{tpu_custom_call.1} parent=1 // loop_footer_branch
      %25 = sbr.rel target = $region3
    $region8: #{tpu_custom_call.1} parent=1 // loop_exit
      _
    %2532 = vsyncpa [#allocation3], 1
    %s2533 = scalar_lea.sflag [#allocation3], 1
    %2534 = vsyncpa %s2533, 1
    %2535 = vsyncpa [#allocation6], 1
    %s2536 = scalar_lea.sflag [#allocation6], 1
    %2537 = vsyncpa %s2536, 1
    %2538 = vsyncpa [#allocation9], 1
    %2539 = vsyncpa [#allocation4], 1
    %s2540 = scalar_lea.sflag [#allocation4], 1
    %2541 = vsyncpa %s2540, 1
    %2542 = vsyncpa [#allocation13], 1
    %s2543 = scalar_lea.sflag [#allocation13], 1
    %2544 = vsyncpa %s2543, 1

</llo_original>
